<compile_context>
chip_gen: v5e
topology: v5e:2x2
jax: 0.10.0
libtpu: 0.0.40
codegen_flags: <defaults>
</compile_context>

<pallas_src>
import functools

import jax
import jax.numpy as jnp
import numpy as np
from jax import lax
from jax.experimental import pallas as pl
from jax.experimental.pallas import tpu as pltpu


def _round_up(x, m):
    return ((x + m - 1) // m) * m


def _vmem_capacity_bytes():
    """Best-effort per-core VMEM capacity; conservative fallback (v7x = 64 MiB)."""
    try:
        info = pltpu.get_tpu_info()
        cap = getattr(info, "vmem_capacity_bytes", None)
        if cap:
            return int(cap)
    except Exception:
        pass
    return 64 * 1024 * 1024


def _pick_tk(f128, tk_cap):
    """Largest multiple of 128 that divides f128 and is <= tk_cap (so f_pad == f128)."""
    if f128 <= tk_cap:
        return f128
    for t in range(tk_cap, 127, -128):
        if f128 % t == 0:
            return t
    return 128


def _end_loss_kernel(alpha, beta, n_true,
                     logits_ref, tgt_col_ref, tgt_row_ref,
                     bias_col_ref, bias_row_ref, d_ref,
                     ce_ref, abs_ref, gram_acc):
    k = pl.program_id(0)

    @pl.when(k == 0)
    def _init():
        gram_acc[...] = jnp.zeros_like(gram_acc)

    # Hot loop: stream one (N_pad, tk) feature tile and accumulate D @ D.T on
    # the MXU.  dot_general contracts the last (lane) dim of BOTH operands so a
    # single VMEM tile feeds both sides; accumulation is f32.
    d = d_ref[...]
    gram_acc[...] += lax.dot_general(
        d, d,
        dimension_numbers=(((1,), (1,)), ((), ())),
        preferred_element_type=jnp.float32)

    @pl.when(k == pl.num_programs(0) - 1)
    def _finalize():
        n_pad, n_cls = logits_ref.shape

        # ---------------- cross entropy (mean over the true batch rows) ----
        logits = logits_ref[...].astype(jnp.float32)
        m = jnp.max(logits, axis=-1, keepdims=True)
        lse = m + jnp.log(jnp.sum(jnp.exp(logits - m), axis=-1, keepdims=True))
        cls_iota = lax.broadcasted_iota(jnp.int32, (n_pad, n_cls), 1)
        picked = jnp.sum(jnp.where(cls_iota == tgt_col_ref[...], logits, 0.0),
                         axis=-1, keepdims=True)
        row_iota = lax.broadcasted_iota(jnp.int32, (n_pad, 1), 0)
        ce_ref[0, 0] = jnp.sum(
            jnp.where(row_iota < n_true, lse - picked, 0.0)) * (1.0 / n_true)

        # ---------------- EnD regularizer ----------------------------------
        # Boolean conditions are built once; the sums apply them with
        # jnp.where(cond, value, 0) directly (no float masks materialized).
        gram = jnp.clip(gram_acc[...], -1.0, 1.0)

        row = lax.broadcasted_iota(jnp.int32, (n_pad, n_pad), 0)
        col = lax.broadcasted_iota(jnp.int32, (n_pad, n_pad), 1)
        # strict lower triangle AND both indices inside the true batch
        pair_valid = jnp.logical_and(
            row > col, jnp.logical_and(row < n_true, col < n_true))

        bias_i = bias_col_ref[...]    # (N, 1): bias label of row i
        bias_j = bias_row_ref[...]    # (1, N): bias label of col j
        tgt_i = tgt_col_ref[...]      # (N, 1)
        tgt_j = tgt_row_ref[...]      # (1, N)

        # abs_orthogonal_blind: pairs (i > j) with the same bias class.
        ortho_cond = jnp.logical_and(pair_valid, bias_i == bias_j)
        ortho_num = jnp.sum(jnp.where(ortho_cond, jnp.abs(gram), 0.0))
        ortho_cnt = jnp.sum(jnp.where(ortho_cond, 1.0, 0.0))
        r_ortho = jnp.where(ortho_cnt > 0.0,
                            ortho_num / jnp.maximum(ortho_cnt, 1.0), 0.0)

        # abs_parallel: pairs (i > j), same target class, bias_i < bias_j
        # (ordered iteration over sorted unique bias classes).
        par_cond = jnp.logical_and(
            pair_valid, jnp.logical_and(tgt_i == tgt_j, bias_i < bias_j))
        par_num = jnp.sum(jnp.where(par_cond, 0.5 * (1.0 + gram), 0.0))
        par_cnt = jnp.sum(jnp.where(par_cond, 1.0, 0.0))
        r_par = jnp.where(par_cnt > 0.0,
                          1.0 - par_num / jnp.maximum(par_cnt, 1.0), 0.0)

        abs_ref[0, 0] = alpha * r_ortho + beta * r_par


def end_loss(output, target_labels, protected_features, features,
             alpha=0.1, beta=0.1, features_dtype=None):
    """Returns (ce_loss, abs_loss) exactly like EnDLoss.forward.

    features_dtype: optionally cast the flattened features (e.g. jnp.bfloat16)
    before the gram matmul — halves HBM traffic and uses the native MXU rate.
    Left None by default so the f32 reference tolerance (1e-4) holds.
    """
    N, C = output.shape
    D = features.reshape(N, -1)                  # free reshape; native dtype
    if features_dtype is not None:
        D = D.astype(features_dtype)
    F = D.shape[1]

    n_pad = _round_up(N, 128)
    f128 = _round_up(F, 128)

    d_item = jnp.dtype(D.dtype).itemsize
    l_item = jnp.dtype(output.dtype).itemsize
    vmem_cap = _vmem_capacity_bytes()

    # Per-generation budget for the double-buffered D tile stream, then pick a
    # tk that divides f128 so f_pad == f128 (no wasted zero columns / MXU passes).
    tile_budget = (32 << 20) if vmem_cap >= (96 << 20) else (16 << 20)
    tk_cap = int(min(max((tile_budget // (2 * n_pad * d_item)) // 128 * 128, 128),
                     4096))
    tk = _pick_tk(f128, tk_cap)
    f_pad = f128
    n_steps = f_pad // tk

    # Skip the wrapper-side pad copy entirely when already aligned (common
    # case: F = 512/2048, batch 128/256); otherwise pad the minimal amount.
    if n_pad == N and f_pad == F:
        d_p = D
    else:
        d_p = jnp.pad(D, ((0, n_pad - N), (0, f_pad - F)))
    logits_p = output if n_pad == N else jnp.pad(output, ((0, n_pad - N), (0, 0)))
    tgt = jnp.pad(target_labels.astype(jnp.int32), (0, n_pad - N))
    bias = jnp.pad(protected_features.astype(jnp.int32), (0, n_pad - N))
    tgt_col, tgt_row = tgt.reshape(n_pad, 1), tgt.reshape(1, n_pad)
    bias_col, bias_row = bias.reshape(n_pad, 1), bias.reshape(1, n_pad)

    # VMEM accounting including the gram accumulator and finalize temporaries.
    n2_bytes = n_pad * n_pad * 4
    c_lanes = _round_up(C, 128)
    vmem_need = (2 * n_pad * tk * d_item            # double-buffered D tiles
                 + n2_bytes                          # gram accumulator scratch
                 + 8 * n2_bytes                      # finalize temporaries
                 + 2 * n_pad * c_lanes * max(l_item, 4)   # resident logits
                 + 16 * n_pad * 4)                   # label row/col vectors
    vmem_limit = int(min(max(vmem_need + (4 << 20), 16 << 20),
                         int(vmem_cap * 0.9)))

    cost = pl.CostEstimate(
        flops=2 * n_pad * n_pad * f_pad + 10 * n_pad * n_pad,
        bytes_accessed=(n_pad * f_pad * d_item
                        + n_pad * C * l_item
                        + 4 * n_pad * 4 + 8),
        transcendentals=n_pad * C,
    )

    kernel = functools.partial(_end_loss_kernel,
                               float(alpha), float(beta), int(N))

    grid_spec = pltpu.PrefetchScalarGridSpec(
        num_scalar_prefetch=0,
        grid=(n_steps,),
        in_specs=[
            pl.BlockSpec((n_pad, C), lambda k: (0, 0)),     # logits (resident)
            pl.BlockSpec((n_pad, 1), lambda k: (0, 0)),     # target col
            pl.BlockSpec((1, n_pad), lambda k: (0, 0)),     # target row
            pl.BlockSpec((n_pad, 1), lambda k: (0, 0)),     # bias col
            pl.BlockSpec((1, n_pad), lambda k: (0, 0)),     # bias row
            pl.BlockSpec((n_pad, tk), lambda k: (0, k)),    # feature tile
        ],
        out_specs=(
            pl.BlockSpec((1, 1), lambda k: (0, 0),
                         memory_space=pltpu.MemorySpace.SMEM),
            pl.BlockSpec((1, 1), lambda k: (0, 0),
                         memory_space=pltpu.MemorySpace.SMEM),
        ),
        scratch_shapes=[pltpu.VMEM((n_pad, n_pad), jnp.float32)],
    )

    ce_out, abs_out = pl.pallas_call(
        kernel,
        out_shape=(jax.ShapeDtypeStruct((1, 1), jnp.float32),
                   jax.ShapeDtypeStruct((1, 1), jnp.float32)),
        grid_spec=grid_spec,
        compiler_params=pltpu.CompilerParams(
            dimension_semantics=("arbitrary",),
            vmem_limit_bytes=vmem_limit),
        cost_estimate=cost,
    )(logits_p, tgt_col, tgt_row, bias_col, bias_row, d_p)
    return ce_out[0, 0], abs_out[0, 0]


# ---------------- pure numpy reference (mirrors the PyTorch code) ----------
def _reference(output, target, bias, features, alpha=0.1, beta=0.1):
    output = np.asarray(output, np.float64)
    target = np.asarray(target)
    bias = np.asarray(bias)
    N = output.shape[0]
    D = np.asarray(features, np.float64).reshape(N, -1)

    m = output.max(-1, keepdims=True)
    lse = m.squeeze(-1) + np.log(np.exp(output - m).sum(-1))
    ce = float(np.mean(lse - output[np.arange(N), target]))

    G = np.clip(np.tril(D @ D.T, -1), -1.0, 1.0)

    ortho, M_tot = 0.0, 0.0
    for b in np.unique(bias):
        mv = (bias == b).astype(np.float64)[:, None]
        mask = np.tril(mv @ mv.T, -1)
        M = mask.sum(); M_tot += M
        if M > 0:
            ortho += np.abs(G * mask).sum()
    if M_tot > 0:
        ortho /= M_tot

    par, M_tot = 0.0, 0.0
    bcs = np.unique(bias)
    for t in np.unique(target):
        cm = (target == t).astype(np.float64)[:, None]
        for idx, b1 in enumerate(bcs):
            bm = (bias == b1).astype(np.float64)[:, None]
            for b2 in bcs[idx:]:
                if b2 == b1:
                    continue
                om = (bias == b2).astype(np.float64)[:, None]
                mask = np.tril((cm * bm) @ (cm * om).T, -1)
                M = mask.sum(); M_tot += M
                if M > 0:
                    par -= ((1.0 + G) * mask * 0.5).sum()
    if M_tot > 0:
        par = 1.0 + par / M_tot

    return ce, alpha * ortho + beta * par


def _check(output, target_labels, protected_features, features,
           alpha=0.1, beta=0.1):
    ce_loss, abs_loss = end_loss(output, target_labels, protected_features,
                                 features, alpha=alpha, beta=beta)
    ce_loss, abs_loss = jax.block_until_ready((ce_loss, abs_loss))
    ce_ref, abs_ref = _reference(np.asarray(output), np.asarray(target_labels),
                                 np.asarray(protected_features),
                                 np.asarray(features), alpha=alpha, beta=beta)
    np.testing.assert_allclose(float(ce_loss), ce_ref, rtol=1e-4, atol=1e-4)
    np.testing.assert_allclose(float(abs_loss), abs_ref, rtol=1e-4, atol=1e-4)


if __name__ == "__main__":
    key = jax.random.PRNGKey(0)
    k1, k2, k3, k4, k5, k6 = jax.random.split(key, 6)

    # --- test 1: tiny shapes, single feature tile ---
    N, C, F_CH = 8, 4, 32
    output = jax.random.normal(k1, (N, C), dtype=jnp.float32)
    # hooked avgpool output, NCHW: (N, F_CH, 1, 1)
    features = 0.15 * jax.random.normal(k2, (N, F_CH, 1, 1), dtype=jnp.float32)
    target_labels = jnp.array([0, 0, 0, 0, 1, 1, 1, 1], dtype=jnp.int32)
    protected_features = jnp.array([1, 0, 1, 0, 1, 0, 0, 1], dtype=jnp.int32)
    _check(output, target_labels, protected_features, features)

    # --- test 2: larger feature dim (still collapses to one grid step) ---
    N2, C2 = 16, 5
    output2 = jax.random.normal(k3, (N2, C2), dtype=jnp.float32)
    features2 = 0.05 * jax.random.normal(k4, (N2, 48, 4, 4), dtype=jnp.float32)
    target_labels2 = jax.random.randint(k5, (N2,), 0, C2, dtype=jnp.int32)
    protected_features2 = jax.random.randint(k6, (N2,), 0, 3, dtype=jnp.int32)
    _check(output2, target_labels2, protected_features2, features2)

    print("KERNEL_OK")
</pallas_src>

<mosaic_0001>
module attributes {stable_mosaic.version = 11 : i64} {
  func.func @_end_loss_kernel(%arg0: i32, %arg1: memref<128x4xf32, #tpu.memory_space<vmem>>, %arg2: memref<128x1xi32, #tpu.memory_space<vmem>>, %arg3: memref<1x128xi32, #tpu.memory_space<vmem>>, %arg4: memref<128x1xi32, #tpu.memory_space<vmem>>, %arg5: memref<1x128xi32, #tpu.memory_space<vmem>>, %arg6: memref<128x128xf32, #tpu.memory_space<vmem>>, %arg7: memref<1x1xf32, #tpu.memory_space<smem>>, %arg8: memref<1x1xf32, #tpu.memory_space<smem>>, %arg9: memref<128x128xf32, #tpu.memory_space<vmem>>) attributes {dimension_semantics = [#tpu.dimension_semantics<arbitrary>], iteration_bounds = array<i64: 1>, scalar_prefetch = 0 : i64, scratch_operands = 1 : i64, tpu.core_type = #tpu.core_type<tc>, window_params = [{pipeline_mode = #tpu.pipeline_mode<synchronous>, transform_indices = @transform_0, window_bounds = array<i64: 128, 4>}, {pipeline_mode = #tpu.pipeline_mode<synchronous>, transform_indices = @transform_1, window_bounds = array<i64: 128, 1>}, {pipeline_mode = #tpu.pipeline_mode<synchronous>, transform_indices = @transform_2, window_bounds = array<i64: 1, 128>}, {pipeline_mode = #tpu.pipeline_mode<synchronous>, transform_indices = @transform_3, window_bounds = array<i64: 128, 1>}, {pipeline_mode = #tpu.pipeline_mode<synchronous>, transform_indices = @transform_4, window_bounds = array<i64: 1, 128>}, {transform_indices = @transform_5, window_bounds = array<i64: 128, 128>}, {transform_indices = @transform_6, window_bounds = array<i64: 1, 1>}, {transform_indices = @transform_7, window_bounds = array<i64: 1, 1>}]} {
    %c0_i32 = arith.constant 0 : i32
    %0 = arith.cmpi eq, %arg0, %c0_i32 : i32
    %1 = arith.extui %0 : i1 to i32
    %c0_i32_0 = arith.constant 0 : i32
    %2 = arith.cmpi ne, %1, %c0_i32_0 : i32
    scf.if %2 {
      %cst_8 = arith.constant 0.000000e+00 : f32
      %11 = vector.broadcast %cst_8 : f32 to vector<128x128xf32>
      %c0_9 = arith.constant 0 : index
      %c0_10 = arith.constant 0 : index
      %12 = vector.load %arg9[%c0_9, %c0_10] : memref<128x128xf32, #tpu.memory_space<vmem>>, vector<128x128xf32>
      tpu.vector_store %arg9[%c0_9, %c0_10], %11 {strides = array<i32>} : memref<128x128xf32, #tpu.memory_space<vmem>>, vector<128x128xf32>,
    } else {
    }
    %c0 = arith.constant 0 : index
    %c0_1 = arith.constant 0 : index
    %3 = vector.load %arg6[%c0, %c0_1] : memref<128x128xf32, #tpu.memory_space<vmem>>, vector<128x128xf32>
    %c0_2 = arith.constant 0 : index
    %c0_3 = arith.constant 0 : index
    %4 = vector.load %arg9[%c0_2, %c0_3] : memref<128x128xf32, #tpu.memory_space<vmem>>, vector<128x128xf32>
    %cst = arith.constant dense<0.000000e+00> : vector<128x128xf32>
    %5 = tpu.matmul %3, %3, %cst {dimension_numbers = #tpu.dot_dimension_numbers<[1], [1], [0], [0], [0, 0, 1, 0], [], []>} : vector<128x128xf32>, vector<128x128xf32>, vector<128x128xf32> -> vector<128x128xf32>
    %6 = arith.addf %4, %5 : vector<128x128xf32>
    %c0_4 = arith.constant 0 : index
    %c0_5 = arith.constant 0 : index
    %7 = vector.load %arg9[%c0_4, %c0_5] : memref<128x128xf32, #tpu.memory_space<vmem>>, vector<128x128xf32>
    tpu.vector_store %arg9[%c0_4, %c0_5], %6 {strides = array<i32>} : memref<128x128xf32, #tpu.memory_space<vmem>>, vector<128x128xf32>,
    %c0_i32_6 = arith.constant 0 : i32
    %8 = arith.cmpi eq, %arg0, %c0_i32_6 : i32
    %9 = arith.extui %8 : i1 to i32
    %c0_i32_7 = arith.constant 0 : i32
    %10 = arith.cmpi ne, %9, %c0_i32_7 : i32
    scf.if %10 {
      %c0_8 = arith.constant 0 : index
      %c0_9 = arith.constant 0 : index
      %11 = vector.load %arg1[%c0_8, %c0_9] : memref<128x4xf32, #tpu.memory_space<vmem>>, vector<128x4xf32>
      %cst_10 = arith.constant dense<0xFF800000> : vector<128xf32>
      %12 = vector.multi_reduction <maximumf>, %11, %cst_10 [1] : vector<128x4xf32> to vector<128xf32>
      %13 = vector.shape_cast %12 : vector<128xf32> to vector<128x1xf32>
      %14 = vector.broadcast %13 : vector<128x1xf32> to vector<128x4xf32>
      %15 = arith.subf %11, %14 : vector<128x4xf32>
      %16 = math.exp %15 : vector<128x4xf32>
      %cst_11 = arith.constant dense<0.000000e+00> : vector<128xf32>
      %17 = vector.multi_reduction <add>, %16, %cst_11 [1] : vector<128x4xf32> to vector<128xf32>
      %18 = vector.shape_cast %17 : vector<128xf32> to vector<128x1xf32>
      %19 = math.log %18 : vector<128x1xf32>
      %20 = arith.addf %13, %19 : vector<128x1xf32>
      %21 = tpu.iota {dimensions = array<i32: 1>} : vector<128x4xi32>
      %c0_12 = arith.constant 0 : index
      %c0_13 = arith.constant 0 : index
      %22 = vector.load %arg2[%c0_12, %c0_13] : memref<128x1xi32, #tpu.memory_space<vmem>>, vector<128x1xi32>
      %23 = vector.broadcast %22 : vector<128x1xi32> to vector<128x4xi32>
      %24 = arith.cmpi eq, %21, %23 : vector<128x4xi32>
      %cst_14 = arith.constant 0.000000e+00 : f32
      %25 = vector.broadcast %cst_14 : f32 to vector<128x4xf32>
      %26 = arith.select %24, %11, %25 : vector<128x4xi1>, vector<128x4xf32>
      %cst_15 = arith.constant dense<0.000000e+00> : vector<128xf32>
      %27 = vector.multi_reduction <add>, %26, %cst_15 [1] : vector<128x4xf32> to vector<128xf32>
      %28 = vector.shape_cast %27 : vector<128xf32> to vector<128x1xf32>
      %29 = tpu.iota {dimensions = array<i32: 0>} : vector<128x1xi32>
      %c8_i32 = arith.constant 8 : i32
      %30 = vector.broadcast %c8_i32 : i32 to vector<128x1xi32>
      %31 = arith.cmpi slt, %29, %30 : vector<128x1xi32>
      %32 = arith.subf %20, %28 : vector<128x1xf32>
      %cst_16 = arith.constant 0.000000e+00 : f32
      %33 = vector.broadcast %cst_16 : f32 to vector<128x1xf32>
      %34 = arith.select %31, %32, %33 : vector<128x1xi1>, vector<128x1xf32>
      %35 = vector.shape_cast %34 : vector<128x1xf32> to vector<1x128x1xf32>
      %cst_17 = arith.constant dense<0.000000e+00> : vector<1xf32>
      %36 = vector.multi_reduction <add>, %35, %cst_17 [1, 2] : vector<1x128x1xf32> to vector<1xf32>
      %37 = vector.shape_cast %36 : vector<1xf32> to vector<1x1x1xf32>
      %38 = vector.extract %37[0, 0, 0] : f32 from vector<1x1x1xf32>
      %cst_18 = arith.constant 1.250000e-01 : f32
      %39 = arith.mulf %38, %cst_18 : f32
      %c0_19 = arith.constant 0 : index
      %c0_20 = arith.constant 0 : index
      %40 = memref.load %arg7[%c0_19, %c0_20] : memref<1x1xf32, #tpu.memory_space<smem>>
      memref.store %39, %arg7[%c0_19, %c0_20] : memref<1x1xf32, #tpu.memory_space<smem>>
      %c0_21 = arith.constant 0 : index
      %c0_22 = arith.constant 0 : index
      %41 = vector.load %arg9[%c0_21, %c0_22] : memref<128x128xf32, #tpu.memory_space<vmem>>, vector<128x128xf32>
      %cst_23 = arith.constant -1.000000e+00 : f32
      %cst_24 = arith.constant 1.000000e+00 : f32
      %42 = vector.broadcast %cst_23 : f32 to vector<128x128xf32>
      %43 = arith.maximumf %42, %41 : vector<128x128xf32>
      %44 = vector.broadcast %cst_24 : f32 to vector<128x128xf32>
      %45 = arith.minimumf %44, %43 : vector<128x128xf32>
      %46 = tpu.iota {dimensions = array<i32: 0>} : vector<128x128xi32>
      %47 = tpu.iota {dimensions = array<i32: 1>} : vector<128x128xi32>
      %48 = arith.cmpi sgt, %46, %47 : vector<128x128xi32>
      %c8_i32_25 = arith.constant 8 : i32
      %49 = vector.broadcast %c8_i32_25 : i32 to vector<128x128xi32>
      %50 = arith.cmpi slt, %46, %49 : vector<128x128xi32>
      %c8_i32_26 = arith.constant 8 : i32
      %51 = vector.broadcast %c8_i32_26 : i32 to vector<128x128xi32>
      %52 = arith.cmpi slt, %47, %51 : vector<128x128xi32>
      %53 = arith.andi %50, %52 : vector<128x128xi1>
      %54 = arith.andi %48, %53 : vector<128x128xi1>
      %c0_27 = arith.constant 0 : index
      %c0_28 = arith.constant 0 : index
      %55 = vector.load %arg4[%c0_27, %c0_28] : memref<128x1xi32, #tpu.memory_space<vmem>>, vector<128x1xi32>
      %c0_29 = arith.constant 0 : index
      %c0_30 = arith.constant 0 : index
      %56 = vector.load %arg5[%c0_29, %c0_30] : memref<1x128xi32, #tpu.memory_space<vmem>>, vector<1x128xi32>
      %c0_31 = arith.constant 0 : index
      %c0_32 = arith.constant 0 : index
      %57 = vector.load %arg2[%c0_31, %c0_32] : memref<128x1xi32, #tpu.memory_space<vmem>>, vector<128x1xi32>
      %c0_33 = arith.constant 0 : index
      %c0_34 = arith.constant 0 : index
      %58 = vector.load %arg3[%c0_33, %c0_34] : memref<1x128xi32, #tpu.memory_space<vmem>>, vector<1x128xi32>
      %59 = vector.broadcast %55 : vector<128x1xi32> to vector<128x128xi32>
      %60 = vector.broadcast %56 : vector<1x128xi32> to vector<128x128xi32>
      %61 = arith.cmpi eq, %59, %60 : vector<128x128xi32>
      %62 = arith.andi %54, %61 : vector<128x128xi1>
      %63 = math.absf %45 : vector<128x128xf32>
      %cst_35 = arith.constant 0.000000e+00 : f32
      %64 = vector.broadcast %cst_35 : f32 to vector<128x128xf32>
      %65 = arith.select %62, %63, %64 : vector<128x128xi1>, vector<128x128xf32>
      %66 = vector.shape_cast %65 : vector<128x128xf32> to vector<1x128x128xf32>
      %cst_36 = arith.constant dense<0.000000e+00> : vector<1xf32>
      %67 = vector.multi_reduction <add>, %66, %cst_36 [1, 2] : vector<1x128x128xf32> to vector<1xf32>
      %68 = vector.shape_cast %67 : vector<1xf32> to vector<1x1x1xf32>
      %69 = vector.extract %68[0, 0, 0] : f32 from vector<1x1x1xf32>
      %cst_37 = arith.constant 1.000000e+00 : f32
      %cst_38 = arith.constant 0.000000e+00 : f32
      %70 = vector.broadcast %cst_37 : f32 to vector<128x128xf32>
      %71 = vector.broadcast %cst_38 : f32 to vector<128x128xf32>
      %72 = arith.select %62, %70, %71 : vector<128x128xi1>, vector<128x128xf32>
      %73 = vector.shape_cast %72 : vector<128x128xf32> to vector<1x128x128xf32>
      %cst_39 = arith.constant dense<0.000000e+00> : vector<1xf32>
      %74 = vector.multi_reduction <add>, %73, %cst_39 [1, 2] : vector<1x128x128xf32> to vector<1xf32>
      %75 = vector.shape_cast %74 : vector<1xf32> to vector<1x1x1xf32>
      %76 = vector.extract %75[0, 0, 0] : f32 from vector<1x1x1xf32>
      %cst_40 = arith.constant 0.000000e+00 : f32
      %77 = arith.cmpf ogt, %76, %cst_40 : f32
      %cst_41 = arith.constant 1.000000e+00 : f32
      %78 = arith.maximumf %76, %cst_41 : f32
      %79 = arith.divf %69, %78 : f32
      %cst_42 = arith.constant 0.000000e+00 : f32
      %80 = arith.select %77, %79, %cst_42 : f32
      %81 = vector.broadcast %57 : vector<128x1xi32> to vector<128x128xi32>
      %82 = vector.broadcast %58 : vector<1x128xi32> to vector<128x128xi32>
      %83 = arith.cmpi eq, %81, %82 : vector<128x128xi32>
      %84 = vector.broadcast %55 : vector<128x1xi32> to vector<128x128xi32>
      %85 = vector.broadcast %56 : vector<1x128xi32> to vector<128x128xi32>
      %86 = arith.cmpi slt, %84, %85 : vector<128x128xi32>
      %87 = arith.andi %83, %86 : vector<128x128xi1>
      %88 = arith.andi %54, %87 : vector<128x128xi1>
      %cst_43 = arith.constant 1.000000e+00 : f32
      %89 = vector.broadcast %cst_43 : f32 to vector<128x128xf32>
      %90 = arith.addf %89, %45 : vector<128x128xf32>
      %cst_44 = arith.constant 5.000000e-01 : f32
      %91 = vector.broadcast %cst_44 : f32 to vector<128x128xf32>
      %92 = arith.mulf %91, %90 : vector<128x128xf32>
      %cst_45 = arith.constant 0.000000e+00 : f32
      %93 = vector.broadcast %cst_45 : f32 to vector<128x128xf32>
      %94 = arith.select %88, %92, %93 : vector<128x128xi1>, vector<128x128xf32>
      %95 = vector.shape_cast %94 : vector<128x128xf32> to vector<1x128x128xf32>
      %cst_46 = arith.constant dense<0.000000e+00> : vector<1xf32>
      %96 = vector.multi_reduction <add>, %95, %cst_46 [1, 2] : vector<1x128x128xf32> to vector<1xf32>
      %97 = vector.shape_cast %96 : vector<1xf32> to vector<1x1x1xf32>
      %98 = vector.extract %97[0, 0, 0] : f32 from vector<1x1x1xf32>
      %cst_47 = arith.constant 1.000000e+00 : f32
      %cst_48 = arith.constant 0.000000e+00 : f32
      %99 = vector.broadcast %cst_47 : f32 to vector<128x128xf32>
      %100 = vector.broadcast %cst_48 : f32 to vector<128x128xf32>
      %101 = arith.select %88, %99, %100 : vector<128x128xi1>, vector<128x128xf32>
      %102 = vector.shape_cast %101 : vector<128x128xf32> to vector<1x128x128xf32>
      %cst_49 = arith.constant dense<0.000000e+00> : vector<1xf32>
      %103 = vector.multi_reduction <add>, %102, %cst_49 [1, 2] : vector<1x128x128xf32> to vector<1xf32>
      %104 = vector.shape_cast %103 : vector<1xf32> to vector<1x1x1xf32>
      %105 = vector.extract %104[0, 0, 0] : f32 from vector<1x1x1xf32>
      %cst_50 = arith.constant 0.000000e+00 : f32
      %106 = arith.cmpf ogt, %105, %cst_50 : f32
      %cst_51 = arith.constant 1.000000e+00 : f32
      %107 = arith.maximumf %105, %cst_51 : f32
      %108 = arith.divf %98, %107 : f32
      %cst_52 = arith.constant 1.000000e+00 : f32
      %109 = arith.subf %cst_52, %108 : f32
      %cst_53 = arith.constant 0.000000e+00 : f32
      %110 = arith.select %106, %109, %cst_53 : f32
      %cst_54 = arith.constant 1.000000e-01 : f32
      %111 = arith.mulf %cst_54, %80 : f32
      %cst_55 = arith.constant 1.000000e-01 : f32
      %112 = arith.mulf %cst_55, %110 : f32
      %113 = arith.addf %111, %112 : f32
      %c0_56 = arith.constant 0 : index
      %c0_57 = arith.constant 0 : index
      %114 = memref.load %arg8[%c0_56, %c0_57] : memref<1x1xf32, #tpu.memory_space<smem>>
      memref.store %113, %arg8[%c0_56, %c0_57] : memref<1x1xf32, #tpu.memory_space<smem>>
    } else {
    }
    return
  }
  func.func @transform_0(%arg0: i32) -> (i32, i32) {
    %c0_i32 = arith.constant 0 : i32
    %c0_i32_0 = arith.constant 0 : i32
    %c0_i32_1 = arith.constant 0 : i32
    return %c0_i32, %c0_i32_0 : i32, i32
  }
  func.func @transform_1(%arg0: i32) -> (i32, i32) {
    %c0_i32 = arith.constant 0 : i32
    %c0_i32_0 = arith.constant 0 : i32
    %c0_i32_1 = arith.constant 0 : i32
    return %c0_i32, %c0_i32_0 : i32, i32
  }
  func.func @transform_2(%arg0: i32) -> (i32, i32) {
    %c0_i32 = arith.constant 0 : i32
    %c0_i32_0 = arith.constant 0 : i32
    %c0_i32_1 = arith.constant 0 : i32
    return %c0_i32, %c0_i32_0 : i32, i32
  }
  func.func @transform_3(%arg0: i32) -> (i32, i32) {
    %c0_i32 = arith.constant 0 : i32
    %c0_i32_0 = arith.constant 0 : i32
    %c0_i32_1 = arith.constant 0 : i32
    return %c0_i32, %c0_i32_0 : i32, i32
  }
  func.func @transform_4(%arg0: i32) -> (i32, i32) {
    %c0_i32 = arith.constant 0 : i32
    %c0_i32_0 = arith.constant 0 : i32
    %c0_i32_1 = arith.constant 0 : i32
    return %c0_i32, %c0_i32_0 : i32, i32
  }
  func.func @transform_5(%arg0: i32) -> (i32, i32) {
    %c0_i32 = arith.constant 0 : i32
    %c0_i32_0 = arith.constant 0 : i32
    return %c0_i32, %arg0 : i32, i32
  }
  func.func @transform_6(%arg0: i32) -> (i32, i32) {
    %c0_i32 = arith.constant 0 : i32
    %c0_i32_0 = arith.constant 0 : i32
    %c0_i32_1 = arith.constant 0 : i32
    return %c0_i32, %c0_i32_0 : i32, i32
  }
  func.func @transform_7(%arg0: i32) -> (i32, i32) {
    %c0_i32 = arith.constant 0 : i32
    %c0_i32_0 = arith.constant 0 : i32
    %c0_i32_1 = arith.constant 0 : i32
    return %c0_i32, %c0_i32_0 : i32, i32
  }
}

</mosaic_0001>

<llo_original>
// kernel: tpu_custom_call.1
$region0: #{tpu_custom_call.1}
  #allocation0 [shape = 'u32[]', space=smem, size = 0x4, offset = 0x4, fixed_abs, tag = 'smem constant byte address 0x4 - core index']
  #allocation1 [shape = 'u32[72,128]{1,0:T(1,128)}', space=vmem, size = 0x9000, scoped, tag = 'internal scratch']
  #allocation2 [shape = 'f32[128,128]{1,0:T(8,128)}', space=vmem, size = 0x10000, scoped, tag = 'scratch operand']
  %s0 = inlined_call_operand.vmem [shape: f32[128,4], index: 0, kind: input, shape index: {}]
  %s1 = inlined_call_operand.vmem [shape: s32[128,1], index: 1, kind: input, shape index: {}]
  %s2 = inlined_call_operand.vmem [shape: s32[1,128], index: 2, kind: input, shape index: {}]
  %s3 = inlined_call_operand.vmem [shape: s32[128,1], index: 3, kind: input, shape index: {}]
  %s4 = inlined_call_operand.vmem [shape: s32[1,128], index: 4, kind: input, shape index: {}]
  %s5 = inlined_call_operand.vmem [shape: f32[128,128], index: 5, kind: input, shape index: {}]
  %s6 = inlined_call_operand.hbm [shape: f32[1,1], index: 6, kind: output, shape index: {0}]
  %s7 = inlined_call_operand.hbm [shape: f32[1,1], index: 7, kind: output, shape index: {1}]
  %8 = xla_tuple %s6, %s7
  %s9 = sld [smem:[#allocation0]]
  $region50: #{tpu_custom_call.1} parent=0
    _
  %s11 = ssub.s32 1, %s9
  %s12 = scalar_select 0, %s11, %s9
  $region1: #{tpu_custom_call.1} parent=0
    #allocation3 [shape = 'u8[512]{0}', space=smem, size = 0x200, scoped, tag = 'output window, operand 0, single buffered']
    #allocation4 [shape = 's32[1]{0}', space=sflag, size = 0x4, scoped, tag = 'scoped memory for tpu_custom_call.1']
    #allocation5 [shape = 'u8[512]{0}', space=smem, size = 0x200, scoped, tag = 'output window, operand 1, single buffered']
    #allocation6 [shape = 's32[1]{0}', space=sflag, size = 0x4, scoped, tag = 'scoped memory for tpu_custom_call.1']
    %13 = vsyncpa [#allocation4], 0
    %14 = vsyncpa [#allocation6], 0
    // Predicated region
    $region2: #{tpu_custom_call.1} parent=1 // pred_check
      _
    $region3: #{tpu_custom_call.1} parent=1 // pred_check_branch
      %16 = sbr.rel (0) target = $region5
    $region4: #{tpu_custom_call.1} parent=1 // pred_region
      _
    $region5: #{tpu_custom_call.1} parent=1 // pred_fallthru
      _
    // Predicated region
    $region6: #{tpu_custom_call.1} parent=1 // pred_check
      _
    $region7: #{tpu_custom_call.1} parent=1 // pred_check_branch
      %18 = sbr.rel (0) target = $region9
    $region8: #{tpu_custom_call.1} parent=1 // pred_region
      _
    $region9: #{tpu_custom_call.1} parent=1 // pred_fallthru
      _
    // Predicated region
    $region10: #{tpu_custom_call.1} parent=1 // pred_check
      _
    $region11: #{tpu_custom_call.1} parent=1 // pred_check_branch
      %20 = sbr.rel (0) target = $region13
    $region12: #{tpu_custom_call.1} parent=1 // pred_region
      _
    $region13: #{tpu_custom_call.1} parent=1 // pred_fallthru
      _
    // Predicated region
    $region14: #{tpu_custom_call.1} parent=1 // pred_check
      _
    $region15: #{tpu_custom_call.1} parent=1 // pred_check_branch
      %22 = sbr.rel (0) target = $region17
    $region16: #{tpu_custom_call.1} parent=1 // pred_region
      _
    $region17: #{tpu_custom_call.1} parent=1 // pred_fallthru
      _
    // Predicated region
    $region18: #{tpu_custom_call.1} parent=1 // pred_check
      _
    $region19: #{tpu_custom_call.1} parent=1 // pred_check_branch
      %24 = sbr.rel (0) target = $region21
    $region20: #{tpu_custom_call.1} parent=1 // pred_region
      _
    $region21: #{tpu_custom_call.1} parent=1 // pred_fallthru
      _
    // Predicated region
    $region22: #{tpu_custom_call.1} parent=1 // pred_check
      _
    $region23: #{tpu_custom_call.1} parent=1 // pred_check_branch
      %26 = sbr.rel (0) target = $region25
    $region24: #{tpu_custom_call.1} parent=1 // pred_region
      _
    $region25: #{tpu_custom_call.1} parent=1 // pred_fallthru
      _
    %p27 = scmp.eq.s32.totalorder 0, 0
    // Predicated region
    $region26: #{tpu_custom_call.1} parent=1 // pred_check
      %p28 = pneg %p27
    $region27: #{tpu_custom_call.1} parent=1 // pred_check_branch
      %30 = sbr.rel (%p28) target = $region29
    $region28: #{tpu_custom_call.1} parent=1 // pred_region
      %31 = vst [vmem:[#allocation2] sm:$0xff] 0.0
      %32 = vst [vmem:[#allocation2 + $0x8] sm:$0xff] 0.0
      %33 = vst [vmem:[#allocation2 + $0x10] sm:$0xff] 0.0
      %34 = vst [vmem:[#allocation2 + $0x18] sm:$0xff] 0.0
      %35 = vst [vmem:[#allocation2 + $0x20] sm:$0xff] 0.0
      %36 = vst [vmem:[#allocation2 + $0x28] sm:$0xff] 0.0
      %37 = vst [vmem:[#allocation2 + $0x30] sm:$0xff] 0.0
      %38 = vst [vmem:[#allocation2 + $0x38] sm:$0xff] 0.0
      %39 = vst [vmem:[#allocation2 + $0x40] sm:$0xff] 0.0
      %40 = vst [vmem:[#allocation2 + $0x48] sm:$0xff] 0.0
      %41 = vst [vmem:[#allocation2 + $0x50] sm:$0xff] 0.0
      %42 = vst [vmem:[#allocation2 + $0x58] sm:$0xff] 0.0
      %43 = vst [vmem:[#allocation2 + $0x60] sm:$0xff] 0.0
      %44 = vst [vmem:[#allocation2 + $0x68] sm:$0xff] 0.0
      %45 = vst [vmem:[#allocation2 + $0x70] sm:$0xff] 0.0
      %46 = vst [vmem:[#allocation2 + $0x78] sm:$0xff] 0.0
    $region29: #{tpu_custom_call.1} parent=1 // pred_fallthru
      _
    %v47 = vld [vmem:[%s5] sm:$0xff]
    %v48 = vld [vmem:[%s5 + $0x8] sm:$0xff]
    %v49 = vld [vmem:[%s5 + $0x10] sm:$0xff]
    %v50 = vld [vmem:[%s5 + $0x18] sm:$0xff]
    %v51 = vld [vmem:[%s5 + $0x20] sm:$0xff]
    %v52 = vld [vmem:[%s5 + $0x28] sm:$0xff]
    %v53 = vld [vmem:[%s5 + $0x30] sm:$0xff]
    %v54 = vld [vmem:[%s5 + $0x38] sm:$0xff]
    %v55 = vld [vmem:[%s5 + $0x40] sm:$0xff]
    %v56 = vld [vmem:[%s5 + $0x48] sm:$0xff]
    %v57 = vld [vmem:[%s5 + $0x50] sm:$0xff]
    %v58 = vld [vmem:[%s5 + $0x58] sm:$0xff]
    %v59 = vld [vmem:[%s5 + $0x60] sm:$0xff]
    %v60 = vld [vmem:[%s5 + $0x68] sm:$0xff]
    %v61 = vld [vmem:[%s5 + $0x70] sm:$0xff]
    %v62 = vld [vmem:[%s5 + $0x78] sm:$0xff]
    %v63 = vld [vmem:[#allocation2] sm:$0xff]
    %v64 = vld [vmem:[#allocation2 + $0x8] sm:$0xff]
    %v65 = vld [vmem:[#allocation2 + $0x10] sm:$0xff]
    %v66 = vld [vmem:[#allocation2 + $0x18] sm:$0xff]
    %v67 = vld [vmem:[#allocation2 + $0x20] sm:$0xff]
    %v68 = vld [vmem:[#allocation2 + $0x28] sm:$0xff]
    %v69 = vld [vmem:[#allocation2 + $0x30] sm:$0xff]
    %v70 = vld [vmem:[#allocation2 + $0x38] sm:$0xff]
    %v71 = vld [vmem:[#allocation2 + $0x40] sm:$0xff]
    %v72 = vld [vmem:[#allocation2 + $0x48] sm:$0xff]
    %v73 = vld [vmem:[#allocation2 + $0x50] sm:$0xff]
    %v74 = vld [vmem:[#allocation2 + $0x58] sm:$0xff]
    %v75 = vld [vmem:[#allocation2 + $0x60] sm:$0xff]
    %v76 = vld [vmem:[#allocation2 + $0x68] sm:$0xff]
    %v77 = vld [vmem:[#allocation2 + $0x70] sm:$0xff]
    %v78 = vld [vmem:[#allocation2 + $0x78] sm:$0xff]
    %79 = vmatpush.xpose.msra.mxu0 %v62
    %80 = vmatpush.xpose.msra.mxu0 %v61
    %81 = vmatpush.xpose.msra.mxu0 %v60
    %82 = vmatpush.xpose.msra.mxu0 %v59
    %83 = vmatpush.xpose.msra.mxu0 %v58
    %84 = vmatpush.xpose.msra.mxu0 %v57
    %85 = vmatpush.xpose.msra.mxu0 %v56
    %86 = vmatpush.xpose.msra.mxu0 %v55
    %87 = vmatpush.xpose.msra.mxu0 %v54
    %88 = vmatpush.xpose.msra.mxu0 %v53
    %89 = vmatpush.xpose.msra.mxu0 %v52
    %90 = vmatpush.xpose.msra.mxu0 %v51
    %91 = vmatpush.xpose.msra.mxu0 %v50
    %92 = vmatpush.xpose.msra.mxu0 %v49
    %93 = vmatpush.xpose.msra.mxu0 %v48
    %94 = vmatpush.xpose.msra.mxu0 %v47
    %95 = vmatmul.f32.gmra.mxu0 %v47
    %v96 = vpop.f32.mrf.mxu0
    %v97 = vadd.f32 0.0, %v96
    %98 = vmatmul.f32.gmra.mxu0 %v48
    %v99 = vpop.f32.mrf.mxu0
    %v100 = vadd.f32 0.0, %v99
    %101 = vmatmul.f32.gmra.mxu0 %v49
    %v102 = vpop.f32.mrf.mxu0
    %v103 = vadd.f32 0.0, %v102
    %104 = vmatmul.f32.gmra.mxu0 %v50
    %v105 = vpop.f32.mrf.mxu0
    %v106 = vadd.f32 0.0, %v105
    %107 = vmatmul.f32.gmra.mxu0 %v51
    %v108 = vpop.f32.mrf.mxu0
    %v109 = vadd.f32 0.0, %v108
    %110 = vmatmul.f32.gmra.mxu0 %v52
    %v111 = vpop.f32.mrf.mxu0
    %v112 = vadd.f32 0.0, %v111
    %113 = vmatmul.f32.gmra.mxu0 %v53
    %v114 = vpop.f32.mrf.mxu0
    %v115 = vadd.f32 0.0, %v114
    %116 = vmatmul.f32.gmra.mxu0 %v54
    %v117 = vpop.f32.mrf.mxu0
    %v118 = vadd.f32 0.0, %v117
    %119 = vmatmul.f32.gmra.mxu0 %v55
    %v120 = vpop.f32.mrf.mxu0
    %v121 = vadd.f32 0.0, %v120
    %122 = vmatmul.f32.gmra.mxu0 %v56
    %v123 = vpop.f32.mrf.mxu0
    %v124 = vadd.f32 0.0, %v123
    %125 = vmatmul.f32.gmra.mxu0 %v57
    %v126 = vpop.f32.mrf.mxu0
    %v127 = vadd.f32 0.0, %v126
    %128 = vmatmul.f32.gmra.mxu0 %v58
    %v129 = vpop.f32.mrf.mxu0
    %v130 = vadd.f32 0.0, %v129
    %131 = vmatmul.f32.gmra.mxu0 %v59
    %v132 = vpop.f32.mrf.mxu0
    %v133 = vadd.f32 0.0, %v132
    %134 = vmatmul.f32.gmra.mxu0 %v60
    %v135 = vpop.f32.mrf.mxu0
    %v136 = vadd.f32 0.0, %v135
    %137 = vmatmul.f32.gmra.mxu0 %v61
    %v138 = vpop.f32.mrf.mxu0
    %v139 = vadd.f32 0.0, %v138
    %140 = vmatmul.f32.gmra.mxu0 %v62
    %v141 = vpop.f32.mrf.mxu0
    %v142 = vadd.f32 0.0, %v141
    %143 = vdwg.mxu0
    %v144 = vadd.f32 %v63, %v97
    %v145 = vadd.f32 %v64, %v100
    %v146 = vadd.f32 %v65, %v103
    %v147 = vadd.f32 %v66, %v106
    %v148 = vadd.f32 %v67, %v109
    %v149 = vadd.f32 %v68, %v112
    %v150 = vadd.f32 %v69, %v115
    %v151 = vadd.f32 %v70, %v118
    %v152 = vadd.f32 %v71, %v121
    %v153 = vadd.f32 %v72, %v124
    %v154 = vadd.f32 %v73, %v127
    %v155 = vadd.f32 %v74, %v130
    %v156 = vadd.f32 %v75, %v133
    %v157 = vadd.f32 %v76, %v136
    %v158 = vadd.f32 %v77, %v139
    %v159 = vadd.f32 %v78, %v142
    %160 = vst [vmem:[#allocation2] sm:$0xff] %v144
    %161 = vst [vmem:[#allocation2 + $0x8] sm:$0xff] %v145
    %162 = vst [vmem:[#allocation2 + $0x10] sm:$0xff] %v146
    %163 = vst [vmem:[#allocation2 + $0x18] sm:$0xff] %v147
    %164 = vst [vmem:[#allocation2 + $0x20] sm:$0xff] %v148
    %165 = vst [vmem:[#allocation2 + $0x28] sm:$0xff] %v149
    %166 = vst [vmem:[#allocation2 + $0x30] sm:$0xff] %v150
    %167 = vst [vmem:[#allocation2 + $0x38] sm:$0xff] %v151
    %168 = vst [vmem:[#allocation2 + $0x40] sm:$0xff] %v152
    %169 = vst [vmem:[#allocation2 + $0x48] sm:$0xff] %v153
    %170 = vst [vmem:[#allocation2 + $0x50] sm:$0xff] %v154
    %171 = vst [vmem:[#allocation2 + $0x58] sm:$0xff] %v155
    %172 = vst [vmem:[#allocation2 + $0x60] sm:$0xff] %v156
    %173 = vst [vmem:[#allocation2 + $0x68] sm:$0xff] %v157
    %174 = vst [vmem:[#allocation2 + $0x70] sm:$0xff] %v158
    %175 = vst [vmem:[#allocation2 + $0x78] sm:$0xff] %v159
    // Predicated region
    $region30: #{tpu_custom_call.1} parent=1 // pred_check
      %p176 = pneg %p27
    $region31: #{tpu_custom_call.1} parent=1 // pred_check_branch
      %178 = sbr.rel (%p176) target = $region33
    $region32: #{tpu_custom_call.1} parent=1 // pred_region
      %v179 = vld [vmem:[%s0] sm:$0xff]
      %v180 = vld [vmem:[%s0 + $0x8] sm:$0xff]
      %v181 = vld [vmem:[%s0 + $0x10] sm:$0xff]
      %v182 = vld [vmem:[%s0 + $0x18] sm:$0xff]
      %v183 = vld [vmem:[%s0 + $0x20] sm:$0xff]
      %v184 = vld [vmem:[%s0 + $0x28] sm:$0xff]
      %v185 = vld [vmem:[%s0 + $0x30] sm:$0xff]
      %v186 = vld [vmem:[%s0 + $0x38] sm:$0xff]
      %v187 = vld [vmem:[%s0 + $0x40] sm:$0xff]
      %v188 = vld [vmem:[%s0 + $0x48] sm:$0xff]
      %v189 = vld [vmem:[%s0 + $0x50] sm:$0xff]
      %v190 = vld [vmem:[%s0 + $0x58] sm:$0xff]
      %v191 = vld [vmem:[%s0 + $0x60] sm:$0xff]
      %v192 = vld [vmem:[%s0 + $0x68] sm:$0xff]
      %v193 = vld [vmem:[%s0 + $0x70] sm:$0xff]
      %v194 = vld [vmem:[%s0 + $0x78] sm:$0xff]
      %vm195 = vcmask 31744
      %v196 = vsel %vm195, %v179, -inf
      %197 = vmax.xlane.f32.xlu0 %v196
      %v198 = vpop.xlane.xlu0 %197
      %v199 = vsel %vm195, %v180, -inf
      %200 = vmax.xlane.f32.xlu0 %v199
      %v201 = vpop.xlane.xlu0 %200
      %v202 = vsel %vm195, %v181, -inf
      %203 = vmax.xlane.f32.xlu0 %v202
      %v204 = vpop.xlane.xlu0 %203
      %v205 = vsel %vm195, %v182, -inf
      %206 = vmax.xlane.f32.xlu0 %v205
      %v207 = vpop.xlane.xlu0 %206
      %v208 = vsel %vm195, %v183, -inf
      %209 = vmax.xlane.f32.xlu0 %v208
      %v210 = vpop.xlane.xlu0 %209
      %v211 = vsel %vm195, %v184, -inf
      %212 = vmax.xlane.f32.xlu0 %v211
      %v213 = vpop.xlane.xlu0 %212
      %v214 = vsel %vm195, %v185, -inf
      %215 = vmax.xlane.f32.xlu0 %v214
      %v216 = vpop.xlane.xlu0 %215
      %v217 = vsel %vm195, %v186, -inf
      %218 = vmax.xlane.f32.xlu0 %v217
      %v219 = vpop.xlane.xlu0 %218
      %v220 = vsel %vm195, %v187, -inf
      %221 = vmax.xlane.f32.xlu0 %v220
      %v222 = vpop.xlane.xlu0 %221
      %v223 = vsel %vm195, %v188, -inf
      %224 = vmax.xlane.f32.xlu0 %v223
      %v225 = vpop.xlane.xlu0 %224
      %v226 = vsel %vm195, %v189, -inf
      %227 = vmax.xlane.f32.xlu0 %v226
      %v228 = vpop.xlane.xlu0 %227
      %v229 = vsel %vm195, %v190, -inf
      %230 = vmax.xlane.f32.xlu0 %v229
      %v231 = vpop.xlane.xlu0 %230
      %v232 = vsel %vm195, %v191, -inf
      %233 = vmax.xlane.f32.xlu0 %v232
      %v234 = vpop.xlane.xlu0 %233
      %v235 = vsel %vm195, %v192, -inf
      %236 = vmax.xlane.f32.xlu0 %v235
      %v237 = vpop.xlane.xlu0 %236
      %v238 = vsel %vm195, %v193, -inf
      %239 = vmax.xlane.f32.xlu0 %v238
      %v240 = vpop.xlane.xlu0 %239
      %v241 = vsel %vm195, %v194, -inf
      %242 = vmax.xlane.f32.xlu0 %v241
      %v243 = vpop.xlane.xlu0 %242
      %v244 = vsub.f32 %v179, %v198
      %v245 = vsub.f32 %v180, %v201
      %v246 = vsub.f32 %v181, %v204
      %v247 = vsub.f32 %v182, %v207
      %v248 = vsub.f32 %v183, %v210
      %v249 = vsub.f32 %v184, %v213
      %v250 = vsub.f32 %v185, %v216
      %v251 = vsub.f32 %v186, %v219
      %v252 = vsub.f32 %v187, %v222
      %v253 = vsub.f32 %v188, %v225
      %v254 = vsub.f32 %v189, %v228
      %v255 = vsub.f32 %v190, %v231
      %v256 = vsub.f32 %v191, %v234
      %v257 = vsub.f32 %v192, %v237
      %v258 = vsub.f32 %v193, %v240
      %v259 = vsub.f32 %v194, %v243
      %v260 = vmul.f32 %v244, 1.442695
      %v261 = vpow.pop %v260
      %v262 = vmul.f32 %v245, 1.442695
      %v263 = vpow.pop %v262
      %v264 = vmul.f32 %v246, 1.442695
      %v265 = vpow.pop %v264
      %v266 = vmul.f32 %v247, 1.442695
      %v267 = vpow.pop %v266
      %v268 = vmul.f32 %v248, 1.442695
      %v269 = vpow.pop %v268
      %v270 = vmul.f32 %v249, 1.442695
      %v271 = vpow.pop %v270
      %v272 = vmul.f32 %v250, 1.442695
      %v273 = vpow.pop %v272
      %v274 = vmul.f32 %v251, 1.442695
      %v275 = vpow.pop %v274
      %v276 = vmul.f32 %v252, 1.442695
      %v277 = vpow.pop %v276
      %v278 = vmul.f32 %v253, 1.442695
      %v279 = vpow.pop %v278
      %v280 = vmul.f32 %v254, 1.442695
      %v281 = vpow.pop %v280
      %v282 = vmul.f32 %v255, 1.442695
      %v283 = vpow.pop %v282
      %v284 = vmul.f32 %v256, 1.442695
      %v285 = vpow.pop %v284
      %v286 = vmul.f32 %v257, 1.442695
      %v287 = vpow.pop %v286
      %v288 = vmul.f32 %v258, 1.442695
      %v289 = vpow.pop %v288
      %v290 = vmul.f32 %v259, 1.442695
      %v291 = vpow.pop %v290
      %v292 = vsel %vm195, %v261, 0.0
      %293 = vadd.xlane.f32.xlu0 %v292
      %v294 = vpop.xlane.xlu0 %293
      %v295 = vsel %vm195, %v263, 0.0
      %296 = vadd.xlane.f32.xlu0 %v295
      %v297 = vpop.xlane.xlu0 %296
      %v298 = vsel %vm195, %v265, 0.0
      %299 = vadd.xlane.f32.xlu0 %v298
      %v300 = vpop.xlane.xlu0 %299
      %v301 = vsel %vm195, %v267, 0.0
      %302 = vadd.xlane.f32.xlu0 %v301
      %v303 = vpop.xlane.xlu0 %302
      %v304 = vsel %vm195, %v269, 0.0
      %305 = vadd.xlane.f32.xlu0 %v304
      %v306 = vpop.xlane.xlu0 %305
      %v307 = vsel %vm195, %v271, 0.0
      %308 = vadd.xlane.f32.xlu0 %v307
      %v309 = vpop.xlane.xlu0 %308
      %v310 = vsel %vm195, %v273, 0.0
      %311 = vadd.xlane.f32.xlu0 %v310
      %v312 = vpop.xlane.xlu0 %311
      %v313 = vsel %vm195, %v275, 0.0
      %314 = vadd.xlane.f32.xlu0 %v313
      %v315 = vpop.xlane.xlu0 %314
      %v316 = vsel %vm195, %v277, 0.0
      %317 = vadd.xlane.f32.xlu0 %v316
      %v318 = vpop.xlane.xlu0 %317
      %v319 = vsel %vm195, %v279, 0.0
      %320 = vadd.xlane.f32.xlu0 %v319
      %v321 = vpop.xlane.xlu0 %320
      %v322 = vsel %vm195, %v281, 0.0
      %323 = vadd.xlane.f32.xlu0 %v322
      %v324 = vpop.xlane.xlu0 %323
      %v325 = vsel %vm195, %v283, 0.0
      %326 = vadd.xlane.f32.xlu0 %v325
      %v327 = vpop.xlane.xlu0 %326
      %v328 = vsel %vm195, %v285, 0.0
      %329 = vadd.xlane.f32.xlu0 %v328
      %v330 = vpop.xlane.xlu0 %329
      %v331 = vsel %vm195, %v287, 0.0
      %332 = vadd.xlane.f32.xlu0 %v331
      %v333 = vpop.xlane.xlu0 %332
      %v334 = vsel %vm195, %v289, 0.0
      %335 = vadd.xlane.f32.xlu0 %v334
      %v336 = vpop.xlane.xlu0 %335
      %v337 = vsel %vm195, %v291, 0.0
      %338 = vadd.xlane.f32.xlu0 %v337
      %v339 = vpop.xlane.xlu0 %338
      %v340 = vlog2.pop %v294
      %v341 = vmul.f32 %v340, 0.6931472
      %v342 = vlog2.pop %v297
      %v343 = vmul.f32 %v342, 0.6931472
      %v344 = vlog2.pop %v300
      %v345 = vmul.f32 %v344, 0.6931472
      %v346 = vlog2.pop %v303
      %v347 = vmul.f32 %v346, 0.6931472
      %v348 = vlog2.pop %v306
      %v349 = vmul.f32 %v348, 0.6931472
      %v350 = vlog2.pop %v309
      %v351 = vmul.f32 %v350, 0.6931472
      %v352 = vlog2.pop %v312
      %v353 = vmul.f32 %v352, 0.6931472
      %v354 = vlog2.pop %v315
      %v355 = vmul.f32 %v354, 0.6931472
      %v356 = vlog2.pop %v318
      %v357 = vmul.f32 %v356, 0.6931472
      %v358 = vlog2.pop %v321
      %v359 = vmul.f32 %v358, 0.6931472
      %v360 = vlog2.pop %v324
      %v361 = vmul.f32 %v360, 0.6931472
      %v362 = vlog2.pop %v327
      %v363 = vmul.f32 %v362, 0.6931472
      %v364 = vlog2.pop %v330
      %v365 = vmul.f32 %v364, 0.6931472
      %v366 = vlog2.pop %v333
      %v367 = vmul.f32 %v366, 0.6931472
      %v368 = vlog2.pop %v336
      %v369 = vmul.f32 %v368, 0.6931472
      %v370 = vlog2.pop %v339
      %v371 = vmul.f32 %v370, 0.6931472
      %v372 = vadd.f32 %v198, %v341
      %v373 = vadd.f32 %v201, %v343
      %v374 = vadd.f32 %v204, %v345
      %v375 = vadd.f32 %v207, %v347
      %v376 = vadd.f32 %v210, %v349
      %v377 = vadd.f32 %v213, %v351
      %v378 = vadd.f32 %v216, %v353
      %v379 = vadd.f32 %v219, %v355
      %v380 = vadd.f32 %v222, %v357
      %v381 = vadd.f32 %v225, %v359
      %v382 = vadd.f32 %v228, %v361
      %v383 = vadd.f32 %v231, %v363
      %v384 = vadd.f32 %v234, %v365
      %v385 = vadd.f32 %v237, %v367
      %v386 = vadd.f32 %v240, %v369
      %v387 = vadd.f32 %v243, %v371
      %v388 = vlaneseq
      %v389 = vand.u32 %v388, 127
      %v390 = vld [vmem:[%s1] sm:$0xff]
      %v391 = vld [vmem:[%s1 + $0x8] sm:$0xff]
      %v392 = vld [vmem:[%s1 + $0x10] sm:$0xff]
      %v393 = vld [vmem:[%s1 + $0x18] sm:$0xff]
      %v394 = vld [vmem:[%s1 + $0x20] sm:$0xff]
      %v395 = vld [vmem:[%s1 + $0x28] sm:$0xff]
      %v396 = vld [vmem:[%s1 + $0x30] sm:$0xff]
      %v397 = vld [vmem:[%s1 + $0x38] sm:$0xff]
      %v398 = vld [vmem:[%s1 + $0x40] sm:$0xff]
      %v399 = vld [vmem:[%s1 + $0x48] sm:$0xff]
      %v400 = vld [vmem:[%s1 + $0x50] sm:$0xff]
      %v401 = vld [vmem:[%s1 + $0x58] sm:$0xff]
      %v402 = vld [vmem:[%s1 + $0x60] sm:$0xff]
      %v403 = vld [vmem:[%s1 + $0x68] sm:$0xff]
      %v404 = vld [vmem:[%s1 + $0x70] sm:$0xff]
      %v405 = vld [vmem:[%s1 + $0x78] sm:$0xff]
      %406 = vset.pattern.permute.xlu0 0
      %407 = vperm.xlu0 %406, %v390
      %v408 = vpop.permute.xlu0 %407
      %409 = vset.pattern.permute.xlu0 0
      %410 = vperm.xlu0 %409, %v391
      %v411 = vpop.permute.xlu0 %410
      %412 = vset.pattern.permute.xlu0 0
      %413 = vperm.xlu0 %412, %v392
      %v414 = vpop.permute.xlu0 %413
      %415 = vset.pattern.permute.xlu0 0
      %416 = vperm.xlu0 %415, %v393
      %v417 = vpop.permute.xlu0 %416
      %418 = vset.pattern.permute.xlu0 0
      %419 = vperm.xlu0 %418, %v394
      %v420 = vpop.permute.xlu0 %419
      %421 = vset.pattern.permute.xlu0 0
      %422 = vperm.xlu0 %421, %v395
      %v423 = vpop.permute.xlu0 %422
      %424 = vset.pattern.permute.xlu0 0
      %425 = vperm.xlu0 %424, %v396
      %v426 = vpop.permute.xlu0 %425
      %427 = vset.pattern.permute.xlu0 0
      %428 = vperm.xlu0 %427, %v397
      %v429 = vpop.permute.xlu0 %428
      %430 = vset.pattern.permute.xlu0 0
      %431 = vperm.xlu0 %430, %v398
      %v432 = vpop.permute.xlu0 %431
      %433 = vset.pattern.permute.xlu0 0
      %434 = vperm.xlu0 %433, %v399
      %v435 = vpop.permute.xlu0 %434
      %436 = vset.pattern.permute.xlu0 0
      %437 = vperm.xlu0 %436, %v400
      %v438 = vpop.permute.xlu0 %437
      %439 = vset.pattern.permute.xlu0 0
      %440 = vperm.xlu0 %439, %v401
      %v441 = vpop.permute.xlu0 %440
      %442 = vset.pattern.permute.xlu0 0
      %443 = vperm.xlu0 %442, %v402
      %v444 = vpop.permute.xlu0 %443
      %445 = vset.pattern.permute.xlu0 0
      %446 = vperm.xlu0 %445, %v403
      %v447 = vpop.permute.xlu0 %446
      %448 = vset.pattern.permute.xlu0 0
      %449 = vperm.xlu0 %448, %v404
      %v450 = vpop.permute.xlu0 %449
      %451 = vset.pattern.permute.xlu0 0
      %452 = vperm.xlu0 %451, %v405
      %v453 = vpop.permute.xlu0 %452
      %vm454 = vcmp.eq.s32.totalorder %v389, %v408
      %vm455 = vcmp.eq.s32.totalorder %v389, %v411
      %vm456 = vcmp.eq.s32.totalorder %v389, %v414
      %vm457 = vcmp.eq.s32.totalorder %v389, %v417
      %vm458 = vcmp.eq.s32.totalorder %v389, %v420
      %vm459 = vcmp.eq.s32.totalorder %v389, %v423
      %vm460 = vcmp.eq.s32.totalorder %v389, %v426
      %vm461 = vcmp.eq.s32.totalorder %v389, %v429
      %vm462 = vcmp.eq.s32.totalorder %v389, %v432
      %vm463 = vcmp.eq.s32.totalorder %v389, %v435
      %vm464 = vcmp.eq.s32.totalorder %v389, %v438
      %vm465 = vcmp.eq.s32.totalorder %v389, %v441
      %vm466 = vcmp.eq.s32.totalorder %v389, %v444
      %vm467 = vcmp.eq.s32.totalorder %v389, %v447
      %vm468 = vcmp.eq.s32.totalorder %v389, %v450
      %vm469 = vcmp.eq.s32.totalorder %v389, %v453
      %v470 = vsel %vm454, %v179, 0.0
      %v471 = vsel %vm455, %v180, 0.0
      %v472 = vsel %vm456, %v181, 0.0
      %v473 = vsel %vm457, %v182, 0.0
      %v474 = vsel %vm458, %v183, 0.0
      %v475 = vsel %vm459, %v184, 0.0
      %v476 = vsel %vm460, %v185, 0.0
      %v477 = vsel %vm461, %v186, 0.0
      %v478 = vsel %vm462, %v187, 0.0
      %v479 = vsel %vm463, %v188, 0.0
      %v480 = vsel %vm464, %v189, 0.0
      %v481 = vsel %vm465, %v190, 0.0
      %v482 = vsel %vm466, %v191, 0.0
      %v483 = vsel %vm467, %v192, 0.0
      %v484 = vsel %vm468, %v193, 0.0
      %v485 = vsel %vm469, %v194, 0.0
      %v486 = vsel %vm195, %v470, 0.0
      %487 = vadd.xlane.f32.xlu0 %v486
      %v488 = vpop.xlane.xlu0 %487
      %v489 = vsel %vm195, %v471, 0.0
      %490 = vadd.xlane.f32.xlu0 %v489
      %v491 = vpop.xlane.xlu0 %490
      %v492 = vsel %vm195, %v472, 0.0
      %493 = vadd.xlane.f32.xlu0 %v492
      %v494 = vpop.xlane.xlu0 %493
      %v495 = vsel %vm195, %v473, 0.0
      %496 = vadd.xlane.f32.xlu0 %v495
      %v497 = vpop.xlane.xlu0 %496
      %v498 = vsel %vm195, %v474, 0.0
      %499 = vadd.xlane.f32.xlu0 %v498
      %v500 = vpop.xlane.xlu0 %499
      %v501 = vsel %vm195, %v475, 0.0
      %502 = vadd.xlane.f32.xlu0 %v501
      %v503 = vpop.xlane.xlu0 %502
      %v504 = vsel %vm195, %v476, 0.0
      %505 = vadd.xlane.f32.xlu0 %v504
      %v506 = vpop.xlane.xlu0 %505
      %v507 = vsel %vm195, %v477, 0.0
      %508 = vadd.xlane.f32.xlu0 %v507
      %v509 = vpop.xlane.xlu0 %508
      %v510 = vsel %vm195, %v478, 0.0
      %511 = vadd.xlane.f32.xlu0 %v510
      %v512 = vpop.xlane.xlu0 %511
      %v513 = vsel %vm195, %v479, 0.0
      %514 = vadd.xlane.f32.xlu0 %v513
      %v515 = vpop.xlane.xlu0 %514
      %v516 = vsel %vm195, %v480, 0.0
      %517 = vadd.xlane.f32.xlu0 %v516
      %v518 = vpop.xlane.xlu0 %517
      %v519 = vsel %vm195, %v481, 0.0
      %520 = vadd.xlane.f32.xlu0 %v519
      %v521 = vpop.xlane.xlu0 %520
      %v522 = vsel %vm195, %v482, 0.0
      %523 = vadd.xlane.f32.xlu0 %v522
      %v524 = vpop.xlane.xlu0 %523
      %v525 = vsel %vm195, %v483, 0.0
      %526 = vadd.xlane.f32.xlu0 %v525
      %v527 = vpop.xlane.xlu0 %526
      %v528 = vsel %vm195, %v484, 0.0
      %529 = vadd.xlane.f32.xlu0 %v528
      %v530 = vpop.xlane.xlu0 %529
      %v531 = vsel %vm195, %v485, 0.0
      %532 = vadd.xlane.f32.xlu0 %v531
      %v533 = vpop.xlane.xlu0 %532
      %v534 = vlaneseq
      %v535 = vshrl.u32 %v534, 7
      %v536 = vadd.s32 %v535, 8
      %v537 = vadd.s32 %v535, 16
      %v538 = vadd.s32 %v535, 24
      %v539 = vadd.s32 %v535, 32
      %v540 = vadd.s32 %v535, 40
      %v541 = vadd.s32 %v535, 48
      %v542 = vadd.s32 %v535, 56
      %v543 = vadd.s32 %v535, 64
      %v544 = vadd.s32 %v535, 72
      %v545 = vadd.s32 %v535, 80
      %v546 = vadd.s32 %v535, 88
      %v547 = vadd.s32 %v535, 96
      %v548 = vadd.s32 %v535, 104
      %v549 = vadd.s32 %v535, 112
      %v550 = vadd.s32 %v535, 120
      %vm551 = vcmp.lt.s32.totalorder %v535, 8
      %vm552 = vcmp.lt.s32.totalorder %v536, 8
      %vm553 = vcmp.lt.s32.totalorder %v537, 8
      %vm554 = vcmp.lt.s32.totalorder %v538, 8
      %vm555 = vcmp.lt.s32.totalorder %v539, 8
      %vm556 = vcmp.lt.s32.totalorder %v540, 8
      %vm557 = vcmp.lt.s32.totalorder %v541, 8
      %vm558 = vcmp.lt.s32.totalorder %v542, 8
      %vm559 = vcmp.lt.s32.totalorder %v543, 8
      %vm560 = vcmp.lt.s32.totalorder %v544, 8
      %vm561 = vcmp.lt.s32.totalorder %v545, 8
      %vm562 = vcmp.lt.s32.totalorder %v546, 8
      %vm563 = vcmp.lt.s32.totalorder %v547, 8
      %vm564 = vcmp.lt.s32.totalorder %v548, 8
      %vm565 = vcmp.lt.s32.totalorder %v549, 8
      %vm566 = vcmp.lt.s32.totalorder %v550, 8
      %v567 = vsub.f32 %v372, %v488
      %v568 = vsub.f32 %v373, %v491
      %v569 = vsub.f32 %v374, %v494
      %v570 = vsub.f32 %v375, %v497
      %v571 = vsub.f32 %v376, %v500
      %v572 = vsub.f32 %v377, %v503
      %v573 = vsub.f32 %v378, %v506
      %v574 = vsub.f32 %v379, %v509
      %v575 = vsub.f32 %v380, %v512
      %v576 = vsub.f32 %v381, %v515
      %v577 = vsub.f32 %v382, %v518
      %v578 = vsub.f32 %v383, %v521
      %v579 = vsub.f32 %v384, %v524
      %v580 = vsub.f32 %v385, %v527
      %v581 = vsub.f32 %v386, %v530
      %v582 = vsub.f32 %v387, %v533
      %v583 = vsel %vm551, %v567, 0.0
      %v584 = vsel %vm552, %v568, 0.0
      %v585 = vsel %vm553, %v569, 0.0
      %v586 = vsel %vm554, %v570, 0.0
      %v587 = vsel %vm555, %v571, 0.0
      %v588 = vsel %vm556, %v572, 0.0
      %v589 = vsel %vm557, %v573, 0.0
      %v590 = vsel %vm558, %v574, 0.0
      %v591 = vsel %vm559, %v575, 0.0
      %v592 = vsel %vm560, %v576, 0.0
      %v593 = vsel %vm561, %v577, 0.0
      %v594 = vsel %vm562, %v578, 0.0
      %v595 = vsel %vm563, %v579, 0.0
      %v596 = vsel %vm564, %v580, 0.0
      %v597 = vsel %vm565, %v581, 0.0
      %v598 = vsel %vm566, %v582, 0.0
      %vm599 = vcmask 7168
      %v600 = vsel %vm599, %v583, 0.0
      %v601 = vsel %vm599, %v584, 0.0
      %v602 = vadd.f32 %v600, %v601
      %v603 = vsel %vm599, %v585, 0.0
      %v604 = vadd.f32 %v602, %v603
      %v605 = vsel %vm599, %v586, 0.0
      %v606 = vadd.f32 %v604, %v605
      %v607 = vsel %vm599, %v587, 0.0
      %v608 = vadd.f32 %v606, %v607
      %v609 = vsel %vm599, %v588, 0.0
      %v610 = vadd.f32 %v608, %v609
      %v611 = vsel %vm599, %v589, 0.0
      %v612 = vadd.f32 %v610, %v611
      %v613 = vsel %vm599, %v590, 0.0
      %v614 = vadd.f32 %v612, %v613
      %v615 = vsel %vm599, %v591, 0.0
      %v616 = vadd.f32 %v614, %v615
      %v617 = vsel %vm599, %v592, 0.0
      %v618 = vadd.f32 %v616, %v617
      %v619 = vsel %vm599, %v593, 0.0
      %v620 = vadd.f32 %v618, %v619
      %v621 = vsel %vm599, %v594, 0.0
      %v622 = vadd.f32 %v620, %v621
      %v623 = vsel %vm599, %v595, 0.0
      %v624 = vadd.f32 %v622, %v623
      %v625 = vsel %vm599, %v596, 0.0
      %v626 = vadd.f32 %v624, %v625
      %v627 = vsel %vm599, %v597, 0.0
      %v628 = vadd.f32 %v626, %v627
      %v629 = vsel %vm599, %v598, 0.0
      %v630 = vadd.f32 %v628, %v629
      %631 = vadd.xlane.f32.xlu0 %v630
      %v632 = vpop.xlane.xlu0 %631
      %v633 = vrot.slane %v632, 4
      %v634 = vadd.f32 %v632, %v633
      %v635 = vrot.slane %v634, 2
      %v636 = vadd.f32 %v634, %v635
      %v637 = vrot.slane %v636, 1
      %v638 = vadd.f32 %v636, %v637
      %s639 = vtos %v638
      %s640 = smul.f32 %s639, 0.125
      %s641 = scalar_lea.smem [#allocation3], 0
      %642 = sst [smem:[%s641]] %s640
      %v643 = vld [vmem:[#allocation2] sm:$0xff]
      %v644 = vld [vmem:[#allocation2 + $0x8] sm:$0xff]
      %v645 = vld [vmem:[#allocation2 + $0x10] sm:$0xff]
      %v646 = vld [vmem:[#allocation2 + $0x18] sm:$0xff]
      %v647 = vld [vmem:[#allocation2 + $0x20] sm:$0xff]
      %v648 = vld [vmem:[#allocation2 + $0x28] sm:$0xff]
      %v649 = vld [vmem:[#allocation2 + $0x30] sm:$0xff]
      %v650 = vld [vmem:[#allocation2 + $0x38] sm:$0xff]
      %v651 = vld [vmem:[#allocation2 + $0x40] sm:$0xff]
      %v652 = vld [vmem:[#allocation2 + $0x48] sm:$0xff]
      %v653 = vld [vmem:[#allocation2 + $0x50] sm:$0xff]
      %v654 = vld [vmem:[#allocation2 + $0x58] sm:$0xff]
      %v655 = vld [vmem:[#allocation2 + $0x60] sm:$0xff]
      %v656 = vld [vmem:[#allocation2 + $0x68] sm:$0xff]
      %v657 = vld [vmem:[#allocation2 + $0x70] sm:$0xff]
      %v658 = vld [vmem:[#allocation2 + $0x78] sm:$0xff]
      %v659 = vmax.f32 %v643, -1.0
      %v660 = vmax.f32 %v644, -1.0
      %v661 = vmax.f32 %v645, -1.0
      %v662 = vmax.f32 %v646, -1.0
      %v663 = vmax.f32 %v647, -1.0
      %v664 = vmax.f32 %v648, -1.0
      %v665 = vmax.f32 %v649, -1.0
      %v666 = vmax.f32 %v650, -1.0
      %v667 = vmax.f32 %v651, -1.0
      %v668 = vmax.f32 %v652, -1.0
      %v669 = vmax.f32 %v653, -1.0
      %v670 = vmax.f32 %v654, -1.0
      %v671 = vmax.f32 %v655, -1.0
      %v672 = vmax.f32 %v656, -1.0
      %v673 = vmax.f32 %v657, -1.0
      %v674 = vmax.f32 %v658, -1.0
      %v675 = vmin.f32 %v659, 1.0
      %v676 = vmin.f32 %v660, 1.0
      %v677 = vmin.f32 %v661, 1.0
      %v678 = vmin.f32 %v662, 1.0
      %v679 = vmin.f32 %v663, 1.0
      %v680 = vmin.f32 %v664, 1.0
      %v681 = vmin.f32 %v665, 1.0
      %v682 = vmin.f32 %v666, 1.0
      %v683 = vmin.f32 %v667, 1.0
      %v684 = vmin.f32 %v668, 1.0
      %v685 = vmin.f32 %v669, 1.0
      %v686 = vmin.f32 %v670, 1.0
      %v687 = vmin.f32 %v671, 1.0
      %v688 = vmin.f32 %v672, 1.0
      %v689 = vmin.f32 %v673, 1.0
      %v690 = vmin.f32 %v674, 1.0
      %vm691 = vcmp.gt.s32.totalorder %v535, %v389
      %vm692 = vcmp.gt.s32.totalorder %v536, %v389
      %vm693 = vcmp.gt.s32.totalorder %v537, %v389
      %vm694 = vcmp.gt.s32.totalorder %v538, %v389
      %vm695 = vcmp.gt.s32.totalorder %v539, %v389
      %vm696 = vcmp.gt.s32.totalorder %v540, %v389
      %vm697 = vcmp.gt.s32.totalorder %v541, %v389
      %vm698 = vcmp.gt.s32.totalorder %v542, %v389
      %vm699 = vcmp.gt.s32.totalorder %v543, %v389
      %vm700 = vcmp.gt.s32.totalorder %v544, %v389
      %vm701 = vcmp.gt.s32.totalorder %v545, %v389
      %vm702 = vcmp.gt.s32.totalorder %v546, %v389
      %vm703 = vcmp.gt.s32.totalorder %v547, %v389
      %vm704 = vcmp.gt.s32.totalorder %v548, %v389
      %vm705 = vcmp.gt.s32.totalorder %v549, %v389
      %vm706 = vcmp.gt.s32.totalorder %v550, %v389
      %vm707 = vcmp.lt.s32.totalorder %v389, 8
      %vm708 = vmand %vm551, %vm707
      %vm709 = vmand %vm552, %vm707
      %vm710 = vmand %vm553, %vm707
      %vm711 = vmand %vm554, %vm707
      %vm712 = vmand %vm555, %vm707
      %vm713 = vmand %vm556, %vm707
      %vm714 = vmand %vm557, %vm707
      %vm715 = vmand %vm558, %vm707
      %vm716 = vmand %vm559, %vm707
      %vm717 = vmand %vm560, %vm707
      %vm718 = vmand %vm561, %vm707
      %vm719 = vmand %vm562, %vm707
      %vm720 = vmand %vm563, %vm707
      %vm721 = vmand %vm564, %vm707
      %vm722 = vmand %vm565, %vm707
      %vm723 = vmand %vm566, %vm707
      %vm724 = vmand %vm691, %vm708
      %vm725 = vmand %vm692, %vm709
      %vm726 = vmand %vm693, %vm710
      %vm727 = vmand %vm694, %vm711
      %vm728 = vmand %vm695, %vm712
      %vm729 = vmand %vm696, %vm713
      %vm730 = vmand %vm697, %vm714
      %vm731 = vmand %vm698, %vm715
      %vm732 = vmand %vm699, %vm716
      %vm733 = vmand %vm700, %vm717
      %vm734 = vmand %vm701, %vm718
      %vm735 = vmand %vm702, %vm719
      %vm736 = vmand %vm703, %vm720
      %vm737 = vmand %vm704, %vm721
      %vm738 = vmand %vm705, %vm722
      %vm739 = vmand %vm706, %vm723
      %v740 = vld [vmem:[%s3] sm:$0xff]
      %v741 = vld [vmem:[%s3 + $0x8] sm:$0xff]
      %v742 = vld [vmem:[%s3 + $0x10] sm:$0xff]
      %v743 = vld [vmem:[%s3 + $0x18] sm:$0xff]
      %v744 = vld [vmem:[%s3 + $0x20] sm:$0xff]
      %v745 = vld [vmem:[%s3 + $0x28] sm:$0xff]
      %v746 = vld [vmem:[%s3 + $0x30] sm:$0xff]
      %v747 = vld [vmem:[%s3 + $0x38] sm:$0xff]
      %v748 = vld [vmem:[%s3 + $0x40] sm:$0xff]
      %v749 = vld [vmem:[%s3 + $0x48] sm:$0xff]
      %v750 = vld [vmem:[%s3 + $0x50] sm:$0xff]
      %v751 = vld [vmem:[%s3 + $0x58] sm:$0xff]
      %v752 = vld [vmem:[%s3 + $0x60] sm:$0xff]
      %v753 = vld [vmem:[%s3 + $0x68] sm:$0xff]
      %v754 = vld [vmem:[%s3 + $0x70] sm:$0xff]
      %v755 = vld [vmem:[%s3 + $0x78] sm:$0xff]
      %v756 = vld [vmem:[%s4] sm:$0x1]
      %v757 = vld [vmem:[%s1] sm:$0xff]
      %v758 = vld [vmem:[%s1 + $0x8] sm:$0xff]
      %v759 = vld [vmem:[%s1 + $0x10] sm:$0xff]
      %v760 = vld [vmem:[%s1 + $0x18] sm:$0xff]
      %v761 = vld [vmem:[%s1 + $0x20] sm:$0xff]
      %v762 = vld [vmem:[%s1 + $0x28] sm:$0xff]
      %v763 = vld [vmem:[%s1 + $0x30] sm:$0xff]
      %v764 = vld [vmem:[%s1 + $0x38] sm:$0xff]
      %v765 = vld [vmem:[%s1 + $0x40] sm:$0xff]
      %v766 = vld [vmem:[%s1 + $0x48] sm:$0xff]
      %v767 = vld [vmem:[%s1 + $0x50] sm:$0xff]
      %v768 = vld [vmem:[%s1 + $0x58] sm:$0xff]
      %v769 = vld [vmem:[%s1 + $0x60] sm:$0xff]
      %v770 = vld [vmem:[%s1 + $0x68] sm:$0xff]
      %v771 = vld [vmem:[%s1 + $0x70] sm:$0xff]
      %v772 = vld [vmem:[%s1 + $0x78] sm:$0xff]
      %v773 = vld [vmem:[%s2] sm:$0x1]
      %774 = vset.pattern.permute.xlu0 0
      %775 = vperm.xlu0 %774, %v740
      %v776 = vpop.permute.xlu0 %775
      %777 = vset.pattern.permute.xlu0 0
      %778 = vperm.xlu0 %777, %v741
      %v779 = vpop.permute.xlu0 %778
      %780 = vset.pattern.permute.xlu0 0
      %781 = vperm.xlu0 %780, %v742
      %v782 = vpop.permute.xlu0 %781
      %783 = vset.pattern.permute.xlu0 0
      %784 = vperm.xlu0 %783, %v743
      %v785 = vpop.permute.xlu0 %784
      %786 = vset.pattern.permute.xlu0 0
      %787 = vperm.xlu0 %786, %v744
      %v788 = vpop.permute.xlu0 %787
      %789 = vset.pattern.permute.xlu0 0
      %790 = vperm.xlu0 %789, %v745
      %v791 = vpop.permute.xlu0 %790
      %792 = vset.pattern.permute.xlu0 0
      %793 = vperm.xlu0 %792, %v746
      %v794 = vpop.permute.xlu0 %793
      %795 = vset.pattern.permute.xlu0 0
      %796 = vperm.xlu0 %795, %v747
      %v797 = vpop.permute.xlu0 %796
      %798 = vset.pattern.permute.xlu0 0
      %799 = vperm.xlu0 %798, %v748
      %v800 = vpop.permute.xlu0 %799
      %801 = vset.pattern.permute.xlu0 0
      %802 = vperm.xlu0 %801, %v749
      %v803 = vpop.permute.xlu0 %802
      %804 = vset.pattern.permute.xlu0 0
      %805 = vperm.xlu0 %804, %v750
      %v806 = vpop.permute.xlu0 %805
      %807 = vset.pattern.permute.xlu0 0
      %808 = vperm.xlu0 %807, %v751
      %v809 = vpop.permute.xlu0 %808
      %810 = vset.pattern.permute.xlu0 0
      %811 = vperm.xlu0 %810, %v752
      %v812 = vpop.permute.xlu0 %811
      %813 = vset.pattern.permute.xlu0 0
      %814 = vperm.xlu0 %813, %v753
      %v815 = vpop.permute.xlu0 %814
      %816 = vset.pattern.permute.xlu0 0
      %817 = vperm.xlu0 %816, %v754
      %v818 = vpop.permute.xlu0 %817
      %819 = vset.pattern.permute.xlu0 0
      %820 = vperm.xlu0 %819, %v755
      %v821 = vpop.permute.xlu0 %820
      %v822 = vperm.slane %v756, 0
      %vm823 = vcmp.eq.s32.totalorder %v776, %v822
      %vm824 = vcmp.eq.s32.totalorder %v779, %v822
      %vm825 = vcmp.eq.s32.totalorder %v782, %v822
      %vm826 = vcmp.eq.s32.totalorder %v785, %v822
      %vm827 = vcmp.eq.s32.totalorder %v788, %v822
      %vm828 = vcmp.eq.s32.totalorder %v791, %v822
      %vm829 = vcmp.eq.s32.totalorder %v794, %v822
      %vm830 = vcmp.eq.s32.totalorder %v797, %v822
      %vm831 = vcmp.eq.s32.totalorder %v800, %v822
      %vm832 = vcmp.eq.s32.totalorder %v803, %v822
      %vm833 = vcmp.eq.s32.totalorder %v806, %v822
      %vm834 = vcmp.eq.s32.totalorder %v809, %v822
      %vm835 = vcmp.eq.s32.totalorder %v812, %v822
      %vm836 = vcmp.eq.s32.totalorder %v815, %v822
      %vm837 = vcmp.eq.s32.totalorder %v818, %v822
      %vm838 = vcmp.eq.s32.totalorder %v821, %v822
      %vm839 = vmand %vm724, %vm823
      %vm840 = vmand %vm725, %vm824
      %vm841 = vmand %vm726, %vm825
      %vm842 = vmand %vm727, %vm826
      %vm843 = vmand %vm728, %vm827
      %vm844 = vmand %vm729, %vm828
      %vm845 = vmand %vm730, %vm829
      %vm846 = vmand %vm731, %vm830
      %vm847 = vmand %vm732, %vm831
      %vm848 = vmand %vm733, %vm832
      %vm849 = vmand %vm734, %vm833
      %vm850 = vmand %vm735, %vm834
      %vm851 = vmand %vm736, %vm835
      %vm852 = vmand %vm737, %vm836
      %vm853 = vmand %vm738, %vm837
      %vm854 = vmand %vm739, %vm838
      %v855 = vand.u32 2147483647, %v675
      %v856 = vand.u32 2147483647, %v676
      %v857 = vand.u32 2147483647, %v677
      %v858 = vand.u32 2147483647, %v678
      %v859 = vand.u32 2147483647, %v679
      %v860 = vand.u32 2147483647, %v680
      %v861 = vand.u32 2147483647, %v681
      %v862 = vand.u32 2147483647, %v682
      %v863 = vand.u32 2147483647, %v683
      %v864 = vand.u32 2147483647, %v684
      %v865 = vand.u32 2147483647, %v685
      %v866 = vand.u32 2147483647, %v686
      %v867 = vand.u32 2147483647, %v687
      %v868 = vand.u32 2147483647, %v688
      %v869 = vand.u32 2147483647, %v689
      %v870 = vand.u32 2147483647, %v690
      %v871 = vsel %vm839, %v855, 0.0
      %v872 = vsel %vm840, %v856, 0.0
      %v873 = vsel %vm841, %v857, 0.0
      %v874 = vsel %vm842, %v858, 0.0
      %v875 = vsel %vm843, %v859, 0.0
      %v876 = vsel %vm844, %v860, 0.0
      %v877 = vsel %vm845, %v861, 0.0
      %v878 = vsel %vm846, %v862, 0.0
      %v879 = vsel %vm847, %v863, 0.0
      %v880 = vsel %vm848, %v864, 0.0
      %v881 = vsel %vm849, %v865, 0.0
      %v882 = vsel %vm850, %v866, 0.0
      %v883 = vsel %vm851, %v867, 0.0
      %v884 = vsel %vm852, %v868, 0.0
      %v885 = vsel %vm853, %v869, 0.0
      %v886 = vsel %vm854, %v870, 0.0
      %v887 = vadd.f32 %v871, %v872
      %v888 = vadd.f32 %v887, %v873
      %v889 = vadd.f32 %v888, %v874
      %v890 = vadd.f32 %v889, %v875
      %v891 = vadd.f32 %v890, %v876
      %v892 = vadd.f32 %v891, %v877
      %v893 = vadd.f32 %v892, %v878
      %v894 = vadd.f32 %v893, %v879
      %v895 = vadd.f32 %v894, %v880
      %v896 = vadd.f32 %v895, %v881
      %v897 = vadd.f32 %v896, %v882
      %v898 = vadd.f32 %v897, %v883
      %v899 = vadd.f32 %v898, %v884
      %v900 = vadd.f32 %v899, %v885
      %v901 = vadd.f32 %v900, %v886
      %902 = vadd.xlane.f32.xlu0 %v901
      %v903 = vpop.xlane.xlu0 %902
      %v904 = vrot.slane %v903, 4
      %v905 = vadd.f32 %v903, %v904
      %v906 = vrot.slane %v905, 2
      %v907 = vadd.f32 %v905, %v906
      %v908 = vrot.slane %v907, 1
      %v909 = vadd.f32 %v907, %v908
      %s910 = vtos %v909
      %v911 = vsel %vm839, 1.0, 0.0
      %v912 = vsel %vm840, 1.0, 0.0
      %v913 = vsel %vm841, 1.0, 0.0
      %v914 = vsel %vm842, 1.0, 0.0
      %v915 = vsel %vm843, 1.0, 0.0
      %v916 = vsel %vm844, 1.0, 0.0
      %v917 = vsel %vm845, 1.0, 0.0
      %v918 = vsel %vm846, 1.0, 0.0
      %v919 = vsel %vm847, 1.0, 0.0
      %v920 = vsel %vm848, 1.0, 0.0
      %v921 = vsel %vm849, 1.0, 0.0
      %v922 = vsel %vm850, 1.0, 0.0
      %v923 = vsel %vm851, 1.0, 0.0
      %v924 = vsel %vm852, 1.0, 0.0
      %v925 = vsel %vm853, 1.0, 0.0
      %v926 = vsel %vm854, 1.0, 0.0
      %v927 = vadd.f32 %v911, %v912
      %v928 = vadd.f32 %v927, %v913
      %v929 = vadd.f32 %v928, %v914
      %v930 = vadd.f32 %v929, %v915
      %v931 = vadd.f32 %v930, %v916
      %v932 = vadd.f32 %v931, %v917
      %v933 = vadd.f32 %v932, %v918
      %v934 = vadd.f32 %v933, %v919
      %v935 = vadd.f32 %v934, %v920
      %v936 = vadd.f32 %v935, %v921
      %v937 = vadd.f32 %v936, %v922
      %v938 = vadd.f32 %v937, %v923
      %v939 = vadd.f32 %v938, %v924
      %v940 = vadd.f32 %v939, %v925
      %v941 = vadd.f32 %v940, %v926
      %942 = vadd.xlane.f32.xlu0 %v941
      %v943 = vpop.xlane.xlu0 %942
      %v944 = vrot.slane %v943, 4
      %v945 = vadd.f32 %v943, %v944
      %v946 = vrot.slane %v945, 2
      %v947 = vadd.f32 %v945, %v946
      %v948 = vrot.slane %v947, 1
      %v949 = vadd.f32 %v947, %v948
      %s950 = vtos %v949
      %p951 = scmp.gt.f32.partialorder %s950, 0.0
      %s952 = smax.f32 %s950, 1.0
      %v953 = vstv %s952
      %v954 = vrcp.pop %v953
      %v955 = vmul.f32 %v953, %v954
      %v956 = vsub.f32 1.0, %v955
      %v957 = vmul.f32 %v954, %v956
      %v958 = vadd.f32 %v954, %v957
      %vm959 = vweird.f32 %v953
      %vm960 = vweird.f32 %v954
      %vm961 = vmor %vm959, %vm960
      %v962 = vsel %vm961, %v954, %v958
      %v963 = vand.u32 2147483647, %v953
      %vm964 = vcmp.eq.f32.partialorder %v963, 8.507059e+37
      %v965 = vand.u32 %v953, 2147483648
      %v966 = vor.u32 1.1754944e-38, %v965
      %v967 = vsel %vm964, %v966, %v962
      %s968 = vtos %v967
      %s969 = smul.f32 %s910, %s968
      %s970 = scalar_select %p951, %s969, 0.0
      %971 = vset.pattern.permute.xlu0 0
      %972 = vperm.xlu0 %971, %v757
      %v973 = vpop.permute.xlu0 %972
      %974 = vset.pattern.permute.xlu0 0
      %975 = vperm.xlu0 %974, %v758
      %v976 = vpop.permute.xlu0 %975
      %977 = vset.pattern.permute.xlu0 0
      %978 = vperm.xlu0 %977, %v759
      %v979 = vpop.permute.xlu0 %978
      %980 = vset.pattern.permute.xlu0 0
      %981 = vperm.xlu0 %980, %v760
      %v982 = vpop.permute.xlu0 %981
      %983 = vset.pattern.permute.xlu0 0
      %984 = vperm.xlu0 %983, %v761
      %v985 = vpop.permute.xlu0 %984
      %986 = vset.pattern.permute.xlu0 0
      %987 = vperm.xlu0 %986, %v762
      %v988 = vpop.permute.xlu0 %987
      %989 = vset.pattern.permute.xlu0 0
      %990 = vperm.xlu0 %989, %v763
      %v991 = vpop.permute.xlu0 %990
      %992 = vset.pattern.permute.xlu0 0
      %993 = vperm.xlu0 %992, %v764
      %v994 = vpop.permute.xlu0 %993
      %995 = vset.pattern.permute.xlu0 0
      %996 = vperm.xlu0 %995, %v765
      %v997 = vpop.permute.xlu0 %996
      %998 = vset.pattern.permute.xlu0 0
      %999 = vperm.xlu0 %998, %v766
      %v1000 = vpop.permute.xlu0 %999
      %1001 = vset.pattern.permute.xlu0 0
      %1002 = vperm.xlu0 %1001, %v767
      %v1003 = vpop.permute.xlu0 %1002
      %1004 = vset.pattern.permute.xlu0 0
      %1005 = vperm.xlu0 %1004, %v768
      %v1006 = vpop.permute.xlu0 %1005
      %1007 = vset.pattern.permute.xlu0 0
      %1008 = vperm.xlu0 %1007, %v769
      %v1009 = vpop.permute.xlu0 %1008
      %1010 = vset.pattern.permute.xlu0 0
      %1011 = vperm.xlu0 %1010, %v770
      %v1012 = vpop.permute.xlu0 %1011
      %1013 = vset.pattern.permute.xlu0 0
      %1014 = vperm.xlu0 %1013, %v771
      %v1015 = vpop.permute.xlu0 %1014
      %1016 = vset.pattern.permute.xlu0 0
      %1017 = vperm.xlu0 %1016, %v772
      %v1018 = vpop.permute.xlu0 %1017
      %v1019 = vperm.slane %v773, 0
      %vm1020 = vcmp.eq.s32.totalorder %v973, %v1019
      %vm1021 = vcmp.eq.s32.totalorder %v976, %v1019
      %vm1022 = vcmp.eq.s32.totalorder %v979, %v1019
      %vm1023 = vcmp.eq.s32.totalorder %v982, %v1019
      %vm1024 = vcmp.eq.s32.totalorder %v985, %v1019
      %vm1025 = vcmp.eq.s32.totalorder %v988, %v1019
      %vm1026 = vcmp.eq.s32.totalorder %v991, %v1019
      %vm1027 = vcmp.eq.s32.totalorder %v994, %v1019
      %vm1028 = vcmp.eq.s32.totalorder %v997, %v1019
      %vm1029 = vcmp.eq.s32.totalorder %v1000, %v1019
      %vm1030 = vcmp.eq.s32.totalorder %v1003, %v1019
      %vm1031 = vcmp.eq.s32.totalorder %v1006, %v1019
      %vm1032 = vcmp.eq.s32.totalorder %v1009, %v1019
      %vm1033 = vcmp.eq.s32.totalorder %v1012, %v1019
      %vm1034 = vcmp.eq.s32.totalorder %v1015, %v1019
      %vm1035 = vcmp.eq.s32.totalorder %v1018, %v1019
      %vm1036 = vcmp.lt.s32.totalorder %v776, %v822
      %vm1037 = vcmp.lt.s32.totalorder %v779, %v822
      %vm1038 = vcmp.lt.s32.totalorder %v782, %v822
      %vm1039 = vcmp.lt.s32.totalorder %v785, %v822
      %vm1040 = vcmp.lt.s32.totalorder %v788, %v822
      %vm1041 = vcmp.lt.s32.totalorder %v791, %v822
      %vm1042 = vcmp.lt.s32.totalorder %v794, %v822
      %vm1043 = vcmp.lt.s32.totalorder %v797, %v822
      %vm1044 = vcmp.lt.s32.totalorder %v800, %v822
      %vm1045 = vcmp.lt.s32.totalorder %v803, %v822
      %vm1046 = vcmp.lt.s32.totalorder %v806, %v822
      %vm1047 = vcmp.lt.s32.totalorder %v809, %v822
      %vm1048 = vcmp.lt.s32.totalorder %v812, %v822
      %vm1049 = vcmp.lt.s32.totalorder %v815, %v822
      %vm1050 = vcmp.lt.s32.totalorder %v818, %v822
      %vm1051 = vcmp.lt.s32.totalorder %v821, %v822
      %vm1052 = vmand %vm1020, %vm1036
      %vm1053 = vmand %vm1021, %vm1037
      %vm1054 = vmand %vm1022, %vm1038
      %vm1055 = vmand %vm1023, %vm1039
      %vm1056 = vmand %vm1024, %vm1040
      %vm1057 = vmand %vm1025, %vm1041
      %vm1058 = vmand %vm1026, %vm1042
      %vm1059 = vmand %vm1027, %vm1043
      %vm1060 = vmand %vm1028, %vm1044
      %vm1061 = vmand %vm1029, %vm1045
      %vm1062 = vmand %vm1030, %vm1046
      %vm1063 = vmand %vm1031, %vm1047
      %vm1064 = vmand %vm1032, %vm1048
      %vm1065 = vmand %vm1033, %vm1049
      %vm1066 = vmand %vm1034, %vm1050
      %vm1067 = vmand %vm1035, %vm1051
      %vm1068 = vmand %vm724, %vm1052
      %vm1069 = vmand %vm725, %vm1053
      %vm1070 = vmand %vm726, %vm1054
      %vm1071 = vmand %vm727, %vm1055
      %vm1072 = vmand %vm728, %vm1056
      %vm1073 = vmand %vm729, %vm1057
      %vm1074 = vmand %vm730, %vm1058
      %vm1075 = vmand %vm731, %vm1059
      %vm1076 = vmand %vm732, %vm1060
      %vm1077 = vmand %vm733, %vm1061
      %vm1078 = vmand %vm734, %vm1062
      %vm1079 = vmand %vm735, %vm1063
      %vm1080 = vmand %vm736, %vm1064
      %vm1081 = vmand %vm737, %vm1065
      %vm1082 = vmand %vm738, %vm1066
      %vm1083 = vmand %vm739, %vm1067
      %v1084 = vadd.f32 %v675, 1.0
      %v1085 = vadd.f32 %v676, 1.0
      %v1086 = vadd.f32 %v677, 1.0
      %v1087 = vadd.f32 %v678, 1.0
      %v1088 = vadd.f32 %v679, 1.0
      %v1089 = vadd.f32 %v680, 1.0
      %v1090 = vadd.f32 %v681, 1.0
      %v1091 = vadd.f32 %v682, 1.0
      %v1092 = vadd.f32 %v683, 1.0
      %v1093 = vadd.f32 %v684, 1.0
      %v1094 = vadd.f32 %v685, 1.0
      %v1095 = vadd.f32 %v686, 1.0
      %v1096 = vadd.f32 %v687, 1.0
      %v1097 = vadd.f32 %v688, 1.0
      %v1098 = vadd.f32 %v689, 1.0
      %v1099 = vadd.f32 %v690, 1.0
      %v1100 = vmul.f32 %v1084, 0.5
      %v1101 = vmul.f32 %v1085, 0.5
      %v1102 = vmul.f32 %v1086, 0.5
      %v1103 = vmul.f32 %v1087, 0.5
      %v1104 = vmul.f32 %v1088, 0.5
      %v1105 = vmul.f32 %v1089, 0.5
      %v1106 = vmul.f32 %v1090, 0.5
      %v1107 = vmul.f32 %v1091, 0.5
      %v1108 = vmul.f32 %v1092, 0.5
      %v1109 = vmul.f32 %v1093, 0.5
      %v1110 = vmul.f32 %v1094, 0.5
      %v1111 = vmul.f32 %v1095, 0.5
      %v1112 = vmul.f32 %v1096, 0.5
      %v1113 = vmul.f32 %v1097, 0.5
      %v1114 = vmul.f32 %v1098, 0.5
      %v1115 = vmul.f32 %v1099, 0.5
      %v1116 = vsel %vm1068, %v1100, 0.0
      %v1117 = vsel %vm1069, %v1101, 0.0
      %v1118 = vsel %vm1070, %v1102, 0.0
      %v1119 = vsel %vm1071, %v1103, 0.0
      %v1120 = vsel %vm1072, %v1104, 0.0
      %v1121 = vsel %vm1073, %v1105, 0.0
      %v1122 = vsel %vm1074, %v1106, 0.0
      %v1123 = vsel %vm1075, %v1107, 0.0
      %v1124 = vsel %vm1076, %v1108, 0.0
      %v1125 = vsel %vm1077, %v1109, 0.0
      %v1126 = vsel %vm1078, %v1110, 0.0
      %v1127 = vsel %vm1079, %v1111, 0.0
      %v1128 = vsel %vm1080, %v1112, 0.0
      %v1129 = vsel %vm1081, %v1113, 0.0
      %v1130 = vsel %vm1082, %v1114, 0.0
      %v1131 = vsel %vm1083, %v1115, 0.0
      %v1132 = vadd.f32 %v1116, %v1117
      %v1133 = vadd.f32 %v1132, %v1118
      %v1134 = vadd.f32 %v1133, %v1119
      %v1135 = vadd.f32 %v1134, %v1120
      %v1136 = vadd.f32 %v1135, %v1121
      %v1137 = vadd.f32 %v1136, %v1122
      %v1138 = vadd.f32 %v1137, %v1123
      %v1139 = vadd.f32 %v1138, %v1124
      %v1140 = vadd.f32 %v1139, %v1125
      %v1141 = vadd.f32 %v1140, %v1126
      %v1142 = vadd.f32 %v1141, %v1127
      %v1143 = vadd.f32 %v1142, %v1128
      %v1144 = vadd.f32 %v1143, %v1129
      %v1145 = vadd.f32 %v1144, %v1130
      %v1146 = vadd.f32 %v1145, %v1131
      %1147 = vadd.xlane.f32.xlu0 %v1146
      %v1148 = vpop.xlane.xlu0 %1147
      %v1149 = vrot.slane %v1148, 4
      %v1150 = vadd.f32 %v1148, %v1149
      %v1151 = vrot.slane %v1150, 2
      %v1152 = vadd.f32 %v1150, %v1151
      %v1153 = vrot.slane %v1152, 1
      %v1154 = vadd.f32 %v1152, %v1153
      %s1155 = vtos %v1154
      %v1156 = vsel %vm1068, 1.0, 0.0
      %v1157 = vsel %vm1069, 1.0, 0.0
      %v1158 = vsel %vm1070, 1.0, 0.0
      %v1159 = vsel %vm1071, 1.0, 0.0
      %v1160 = vsel %vm1072, 1.0, 0.0
      %v1161 = vsel %vm1073, 1.0, 0.0
      %v1162 = vsel %vm1074, 1.0, 0.0
      %v1163 = vsel %vm1075, 1.0, 0.0
      %v1164 = vsel %vm1076, 1.0, 0.0
      %v1165 = vsel %vm1077, 1.0, 0.0
      %v1166 = vsel %vm1078, 1.0, 0.0
      %v1167 = vsel %vm1079, 1.0, 0.0
      %v1168 = vsel %vm1080, 1.0, 0.0
      %v1169 = vsel %vm1081, 1.0, 0.0
      %v1170 = vsel %vm1082, 1.0, 0.0
      %v1171 = vsel %vm1083, 1.0, 0.0
      %v1172 = vadd.f32 %v1156, %v1157
      %v1173 = vadd.f32 %v1172, %v1158
      %v1174 = vadd.f32 %v1173, %v1159
      %v1175 = vadd.f32 %v1174, %v1160
      %v1176 = vadd.f32 %v1175, %v1161
      %v1177 = vadd.f32 %v1176, %v1162
      %v1178 = vadd.f32 %v1177, %v1163
      %v1179 = vadd.f32 %v1178, %v1164
      %v1180 = vadd.f32 %v1179, %v1165
      %v1181 = vadd.f32 %v1180, %v1166
      %v1182 = vadd.f32 %v1181, %v1167
      %v1183 = vadd.f32 %v1182, %v1168
      %v1184 = vadd.f32 %v1183, %v1169
      %v1185 = vadd.f32 %v1184, %v1170
      %v1186 = vadd.f32 %v1185, %v1171
      %1187 = vadd.xlane.f32.xlu0 %v1186
      %v1188 = vpop.xlane.xlu0 %1187
      %v1189 = vrot.slane %v1188, 4
      %v1190 = vadd.f32 %v1188, %v1189
      %v1191 = vrot.slane %v1190, 2
      %v1192 = vadd.f32 %v1190, %v1191
      %v1193 = vrot.slane %v1192, 1
      %v1194 = vadd.f32 %v1192, %v1193
      %s1195 = vtos %v1194
      %p1196 = scmp.gt.f32.partialorder %s1195, 0.0
      %s1197 = smax.f32 %s1195, 1.0
      %v1198 = vstv %s1197
      %v1199 = vrcp.pop %v1198
      %v1200 = vmul.f32 %v1198, %v1199
      %v1201 = vsub.f32 1.0, %v1200
      %v1202 = vmul.f32 %v1199, %v1201
      %v1203 = vadd.f32 %v1199, %v1202
      %vm1204 = vweird.f32 %v1198
      %vm1205 = vweird.f32 %v1199
      %vm1206 = vmor %vm1204, %vm1205
      %v1207 = vsel %vm1206, %v1199, %v1203
      %v1208 = vand.u32 2147483647, %v1198
      %vm1209 = vcmp.eq.f32.partialorder %v1208, 8.507059e+37
      %v1210 = vand.u32 %v1198, 2147483648
      %v1211 = vor.u32 1.1754944e-38, %v1210
      %v1212 = vsel %vm1209, %v1211, %v1207
      %s1213 = vtos %v1212
      %s1214 = smul.f32 %s1155, %s1213
      %s1215 = ssub.f32 1.0, %s1214
      %s1216 = scalar_select %p1196, %s1215, 0.0
      %s1217 = smul.f32 %s970, 0.1
      %s1218 = smul.f32 %s1216, 0.1
      %s1219 = sadd.f32 %s1217, %s1218
      %s1220 = scalar_lea.smem [#allocation5], 0
      %1221 = sst [smem:[%s1220]] %s1219
    $region33: #{tpu_custom_call.1} parent=1 // pred_fallthru
      _
    // Predicated region
    $region34: #{tpu_custom_call.1} parent=1 // pred_check
      _
    $region35: #{tpu_custom_call.1} parent=1 // pred_check_branch
      %1223 = sbr.rel (0) target = $region37
    $region36: #{tpu_custom_call.1} parent=1 // pred_region
      %1225 = vsyncadd [#allocation4], 0
      %s1227 = sshll.u32 %s6, 4
      %s1228 = int_to_ptr.hbm [resolvable:$true] %s1227
      %1230 = dma.smem_to_hbm [#allocation3], 16, %s1228, [#allocation4]
    $region37: #{tpu_custom_call.1} parent=1 // pred_fallthru
      _
    // Predicated region
    $region38: #{tpu_custom_call.1} parent=1 // pred_check
      _
    $region39: #{tpu_custom_call.1} parent=1 // pred_check_branch
      %1232 = sbr.rel (0) target = $region41
    $region40: #{tpu_custom_call.1} parent=1 // pred_region
      %1234 = vsyncadd [#allocation6], 0
      %s1236 = sshll.u32 %s7, 4
      %s1237 = int_to_ptr.hbm [resolvable:$true] %s1236
      %1239 = dma.smem_to_hbm [#allocation5], 16, %s1237, [#allocation6]
    $region41: #{tpu_custom_call.1} parent=1 // pred_fallthru
      _
    // Predicated region
    $region42: #{tpu_custom_call.1} parent=1 // pred_check
      _
    $region43: #{tpu_custom_call.1} parent=1 // pred_check_branch
      %1241 = sbr.rel (0) target = $region45
    $region44: #{tpu_custom_call.1} parent=1 // pred_region
      %1243 = dma.done [#allocation4], 16
    $region45: #{tpu_custom_call.1} parent=1 // pred_fallthru
      _
    // Predicated region
    $region46: #{tpu_custom_call.1} parent=1 // pred_check
      _
    $region47: #{tpu_custom_call.1} parent=1 // pred_check_branch
      %1245 = sbr.rel (0) target = $region49
    $region48: #{tpu_custom_call.1} parent=1 // pred_region
      %1247 = dma.done [#allocation6], 16
    $region49: #{tpu_custom_call.1} parent=1 // pred_fallthru
      _
    %1248 = sfence
    %1249 = vsyncpa [#allocation4], 1
    %1250 = vsyncpa [#allocation6], 1

</llo_original>
